<compile_context>
chip_gen: v6e
topology: v6e:2x2x1
jax: 0.10.0
libtpu: 0.0.40
codegen_flags: <defaults>
</compile_context>

<pallas_src>
import math

import jax
import jax.numpy as jnp
from jax.experimental import pallas as pl
from jax.experimental.pallas import tpu as pltpu

PAD_IDX = 0
LN_EPS = 1e-5        # torch.nn.LayerNorm default


# ----------------------------------------------------------------------------
# Pallas kernel: one single-head transformer encoder layer over a chunk of
# sequences; emits only the position-0 ([CLS]) state per sequence.
# ----------------------------------------------------------------------------
def _encoder_cls_kernel(x_ref, kmask_ref,
                        wqkv_ref, wo_ref,
                        g1_ref, bt1_ref,
                        w1_ref, b1_ref, w2_ref, b2_ref,
                        g2_ref, bt2_ref,
                        cls_ref):
    x = x_ref[...]                              # (B, S, D) f32
    B, S, D = x.shape
    scale = 1.0 / math.sqrt(D)

    x2 = x.reshape(B * S, D)
    x_bf = x2.astype(jnp.bfloat16)

    # Fused QKV projection: one MXU matmul instead of three tiny ones.
    qkv = jnp.dot(x_bf, wqkv_ref[...],
                  preferred_element_type=jnp.float32)        # (B*S, 3D) f32
    q = qkv[:, :D].reshape(B, S, D)
    k = qkv[:, D:2 * D].reshape(B, S, D)
    v = qkv[:, 2 * D:].reshape(B, S, D)

    # Batched self-attention over the chunk.
    scores = jnp.einsum('bqd,bkd->bqk',
                        q.astype(jnp.bfloat16), k.astype(jnp.bfloat16),
                        preferred_element_type=jnp.float32) * scale   # (B, S, S)
    # Additive pad-key mask (kmask is 1.0 for real tokens, 0.0 for padding).
    scores = scores + (kmask_ref[...] - 1.0) * 1e9
    scores = scores - jnp.max(scores, axis=-1, keepdims=True)
    p = jnp.exp(scores)
    p = p * pl.reciprocal(jnp.sum(p, axis=-1, keepdims=True), approx=True)

    attn = jnp.einsum('bqk,bkd->bqd',
                      p.astype(jnp.bfloat16), v.astype(jnp.bfloat16),
                      preferred_element_type=jnp.float32)             # (B, S, D)
    attn = jnp.dot(attn.reshape(B * S, D).astype(jnp.bfloat16), wo_ref[...],
                   preferred_element_type=jnp.float32)                # (B*S, D)

    # Residual + LayerNorm 1 (f32 math).
    h = x2 + attn
    mu = jnp.mean(h, axis=-1, keepdims=True)
    var = jnp.mean((h - mu) ** 2, axis=-1, keepdims=True)
    h = (h - mu) * jax.lax.rsqrt(var + LN_EPS) * g1_ref[...] + bt1_ref[...]

    # Position-wise FFN (bf16 matmuls, f32 accumulation).
    f = jnp.dot(h.astype(jnp.bfloat16), w1_ref[...],
                preferred_element_type=jnp.float32) + b1_ref[...]
    f = jnp.maximum(f, 0.0)
    f = jnp.dot(f.astype(jnp.bfloat16), w2_ref[...],
                preferred_element_type=jnp.float32) + b2_ref[...]

    # Residual + LayerNorm 2.
    y = h + f
    mu = jnp.mean(y, axis=-1, keepdims=True)
    var = jnp.mean((y - mu) ** 2, axis=-1, keepdims=True)
    y = (y - mu) * jax.lax.rsqrt(var + LN_EPS) * g2_ref[...] + bt2_ref[...]

    # Only the [CLS] (position 0) state of each sequence is needed downstream.
    cls_ref[...] = y.reshape(B, S, D)[:, 0, :]


# ----------------------------------------------------------------------------
# Pallas wrapper
# ----------------------------------------------------------------------------
def encoder_cls(x, key_mask, w_bf, params, *, num_chunks):
    """x: [n, S, D] f32, key_mask: [n, 1, S] f32 -> [CLS] states [n, D] f32."""
    n, S, D = x.shape
    Di = w_bf["w1"].shape[1]
    assert n % num_chunks == 0
    B = n // num_chunks

    def w_spec(r, c):
        return pl.BlockSpec((r, c), lambda i: (0, 0))

    out = pl.pallas_call(
        _encoder_cls_kernel,
        out_shape=jax.ShapeDtypeStruct((num_chunks, B, D), jnp.float32),
        grid=(num_chunks,),
        in_specs=[
            pl.BlockSpec((B, S, D), lambda i: (i, 0, 0)),    # x chunk
            pl.BlockSpec((B, 1, S), lambda i: (i, 0, 0)),    # key mask chunk
            w_spec(D, 3 * D), w_spec(D, D),                  # wqkv, wo   (bf16)
            w_spec(1, D), w_spec(1, D),                      # g1, bt1    (f32)
            w_spec(D, Di), w_spec(1, Di),                    # w1 (bf16), b1
            w_spec(Di, D), w_spec(1, D),                     # w2 (bf16), b2
            w_spec(1, D), w_spec(1, D),                      # g2, bt2    (f32)
        ],
        out_specs=pl.BlockSpec((pl.Squeezed(), B, D), lambda i: (i, 0, 0)),
        compiler_params=pltpu.CompilerParams(
            dimension_semantics=("parallel",)),
    )(x, key_mask,
      w_bf["wqkv"], w_bf["wo"],
      params["g1"], params["bt1"],
      w_bf["w1"], params["b1"], w_bf["w2"], params["b2"],
      params["g2"], params["bt2"])
    return out.reshape(n, D)


# ----------------------------------------------------------------------------
# Glue: embedder, params, forward
# ----------------------------------------------------------------------------
def sinusoidal_pos(max_len, d):
    pos = jnp.arange(max_len, dtype=jnp.float32)[:, None]
    i = jnp.arange(d, dtype=jnp.float32)[None, :]
    angle = pos / jnp.power(10000.0, (2.0 * jnp.floor(i / 2.0)) / d)
    return jnp.where(jnp.arange(d)[None, :] % 2 == 0, jnp.sin(angle), jnp.cos(angle))


def init_params(key, d_vocab, d_model, d_inner):
    ks = jax.random.split(key, 10)
    s = 0.05
    emb = jax.random.normal(ks[0], (d_vocab, d_model), jnp.float32) * s
    emb = emb.at[PAD_IDX].set(0.0)     # padding_idx embedding = 0
    return {
        "emb": emb,
        "wq": jax.random.normal(ks[1], (d_model, d_model), jnp.float32) * s,
        "wk": jax.random.normal(ks[2], (d_model, d_model), jnp.float32) * s,
        "wv": jax.random.normal(ks[3], (d_model, d_model), jnp.float32) * s,
        "wo": jax.random.normal(ks[4], (d_model, d_model), jnp.float32) * s,
        "g1": jnp.ones((1, d_model), jnp.float32),
        "bt1": jnp.zeros((1, d_model), jnp.float32),
        "w1": jax.random.normal(ks[5], (d_model, d_inner), jnp.float32) * s,
        "b1": jnp.zeros((1, d_inner), jnp.float32),
        "w2": jax.random.normal(ks[6], (d_inner, d_model), jnp.float32) * s,
        "b2": jnp.zeros((1, d_model), jnp.float32),
        "g2": jnp.ones((1, d_model), jnp.float32),
        "bt2": jnp.zeros((1, d_model), jnp.float32),
        "w_cls": jax.random.normal(ks[7], (1, d_model), jnp.float32) * s,
        "b_cls": jnp.zeros((1, 1), jnp.float32),
        "w_rnk": jax.random.normal(ks[8], (1, d_model), jnp.float32) * s,
        "b_rnk": jnp.zeros((1, 1), jnp.float32),
    }


def qa_model_forward(params, passage_fixed_vectors, query_fixed_vectors):
    """Encoder-only forward (only_encoder / non-answerable path of QaModel)."""
    bs, K, L = passage_fixed_vectors.shape
    D = params["emb"].shape[1]

    # create_masks: only the passage mask is needed on the encoder-only path.
    mask_p = (passage_fixed_vectors != PAD_IDX)                     # [bs, K, L]
    # TODO(synk): the query-side encoding (and mask_q / mask_a) feed only the
    # dual co-attention / decoder, which are not implemented; the query
    # encoder pass is therefore skipped entirely (it was dead work before).
    del query_fixed_vectors

    # Embedder: lookup * sqrt(d) + sinusoidal positions (gather = glue).
    pe = sinusoidal_pos(L, D)
    p_tok = passage_fixed_vectors.reshape(bs * K, L)
    p_emb = params["emb"][p_tok] * math.sqrt(D) + pe[None]          # [bs*K, L, D]

    key_mask = mask_p.reshape(bs * K, 1, L).astype(jnp.float32)     # [bs*K, 1, L]

    # Fused QKV weight + bf16 weight copies for the MXU.
    wqkv = jnp.concatenate([params["wq"], params["wk"], params["wv"]], axis=1)
    w_bf = {
        "wqkv": wqkv.astype(jnp.bfloat16),
        "wo": params["wo"].astype(jnp.bfloat16),
        "w1": params["w1"].astype(jnp.bfloat16),
        "w2": params["w2"].astype(jnp.bfloat16),
    }

    n = bs * K
    # Keep the grid at >=2 steps when possible so v7x's two TensorCores both
    # get work; each step processes a chunk of n/num_chunks sequences.
    num_chunks = 2 if (n % 2 == 0 and n >= 2) else 1

    Mp_cls = encoder_cls(p_emb.astype(jnp.float32), key_mask, w_bf, params,
                         num_chunks=num_chunks)                     # [bs*K, D]
    Mp_cls = Mp_cls.reshape(bs, K, D)

    # Classifier / pointwise Ranker / calc_betas: a few hundred floats — run
    # in plain JAX instead of a dedicated micro pallas_call.
    pooled = jnp.mean(Mp_cls, axis=1)                               # [bs, D]
    cls_scores = jnp.sum(pooled * params["w_cls"], axis=-1) + params["b_cls"][0, 0]
    rnk_scores = jnp.sum(Mp_cls * params["w_rnk"][None], axis=-1) + params["b_rnk"][0, 0]
    betas = jax.nn.sigmoid(rnk_scores)                              # pointwise calc_betas

    # Encoder-only return path of QaModel.forward:
    #   (dec_scores=None, rnk_scores, cls_scores, betas, lambdas=None)
    return None, rnk_scores, cls_scores, betas, None


if __name__ == "__main__":
    bs, K, L, J = 2, 2, 16, 8          # batch, passages, passage len, query len
    d_model, d_inner, d_vocab = 128, 256, 64   # lane-dense d_model (multiple of 128)

    key = jax.random.PRNGKey(0)
    k_par, k_p, k_q = jax.random.split(key, 3)

    params = init_params(k_par, d_vocab, d_model, d_inner)

    passage = jax.random.randint(k_p, (bs, K, L), 1, d_vocab, dtype=jnp.int32)
    passage = passage.at[:, :, 12:].set(PAD_IDX)       # trailing padding
    query = jax.random.randint(k_q, (bs, J), 1, d_vocab, dtype=jnp.int32)
    query = query.at[:, 6:].set(PAD_IDX)

    dec_scores, rnk_scores, cls_scores, betas, lambdas = qa_model_forward(
        params, passage, query)

    jax.block_until_ready((rnk_scores, cls_scores, betas))
    assert rnk_scores.shape == (bs, K)
    assert cls_scores.shape == (bs,)
    assert betas.shape == (bs, K)
    assert bool(jnp.all(jnp.isfinite(rnk_scores)))
    assert bool(jnp.all(jnp.isfinite(cls_scores)))
    print("KERNEL_OK")
</pallas_src>

<mosaic_0001>
module attributes {stable_mosaic.version = 11 : i64} {
  func.func @_encoder_cls_kernel(%arg0: i32, %arg1: memref<2x16x128xf32, #tpu.memory_space<vmem>>, %arg2: memref<2x1x16xf32, #tpu.memory_space<vmem>>, %arg3: memref<128x384xbf16, #tpu.memory_space<vmem>>, %arg4: memref<128x128xbf16, #tpu.memory_space<vmem>>, %arg5: memref<1x128xf32, #tpu.memory_space<vmem>>, %arg6: memref<1x128xf32, #tpu.memory_space<vmem>>, %arg7: memref<128x256xbf16, #tpu.memory_space<vmem>>, %arg8: memref<1x256xf32, #tpu.memory_space<vmem>>, %arg9: memref<256x128xbf16, #tpu.memory_space<vmem>>, %arg10: memref<1x128xf32, #tpu.memory_space<vmem>>, %arg11: memref<1x128xf32, #tpu.memory_space<vmem>>, %arg12: memref<1x128xf32, #tpu.memory_space<vmem>>, %arg13: memref<1x2x128xf32, #tpu.memory_space<vmem>>) attributes {dimension_semantics = [#tpu.dimension_semantics<parallel>], iteration_bounds = array<i64: 2>, scalar_prefetch = 0 : i64, scratch_operands = 0 : i64, tpu.core_type = #tpu.core_type<tc>, window_params = [{transform_indices = @transform_0, window_bounds = array<i64: 2, 16, 128>}, {transform_indices = @transform_1, window_bounds = array<i64: 2, 1, 16>}, {pipeline_mode = #tpu.pipeline_mode<synchronous>, transform_indices = @transform_2, window_bounds = array<i64: 128, 384>}, {pipeline_mode = #tpu.pipeline_mode<synchronous>, transform_indices = @transform_3, window_bounds = array<i64: 128, 128>}, {pipeline_mode = #tpu.pipeline_mode<synchronous>, transform_indices = @transform_4, window_bounds = array<i64: 1, 128>}, {pipeline_mode = #tpu.pipeline_mode<synchronous>, transform_indices = @transform_5, window_bounds = array<i64: 1, 128>}, {pipeline_mode = #tpu.pipeline_mode<synchronous>, transform_indices = @transform_6, window_bounds = array<i64: 128, 256>}, {pipeline_mode = #tpu.pipeline_mode<synchronous>, transform_indices = @transform_7, window_bounds = array<i64: 1, 256>}, {pipeline_mode = #tpu.pipeline_mode<synchronous>, transform_indices = @transform_8, window_bounds = array<i64: 256, 128>}, {pipeline_mode = #tpu.pipeline_mode<synchronous>, transform_indices = @transform_9, window_bounds = array<i64: 1, 128>}, {pipeline_mode = #tpu.pipeline_mode<synchronous>, transform_indices = @transform_10, window_bounds = array<i64: 1, 128>}, {pipeline_mode = #tpu.pipeline_mode<synchronous>, transform_indices = @transform_11, window_bounds = array<i64: 1, 128>}, {transform_indices = @transform_12, window_bounds = array<i64: 1, 2, 128>}]} {
    %c0 = arith.constant 0 : index
    %c0_0 = arith.constant 0 : index
    %c0_1 = arith.constant 0 : index
    %0 = vector.load %arg1[%c0, %c0_0, %c0_1] : memref<2x16x128xf32, #tpu.memory_space<vmem>>, vector<2x16x128xf32>
    %1 = vector.shape_cast %0 : vector<2x16x128xf32> to vector<32x128xf32>
    %2 = arith.truncf %1 : vector<32x128xf32> to vector<32x128xbf16>
    %c0_2 = arith.constant 0 : index
    %c0_3 = arith.constant 0 : index
    %3 = vector.load %arg3[%c0_2, %c0_3] : memref<128x384xbf16, #tpu.memory_space<vmem>>, vector<128x384xbf16>
    %cst = arith.constant dense<0.000000e+00> : vector<32x384xf32>
    %4 = tpu.matmul %2, %3, %cst {dimension_numbers = #tpu.dot_dimension_numbers<[1], [0], [0], [1], [0, 0, 1, 1], [], []>} : vector<32x128xbf16>, vector<128x384xbf16>, vector<32x384xf32> -> vector<32x384xf32>
    %5 = vector.extract_strided_slice %4 {offsets = [0, 0], sizes = [32, 128], strides = [1, 1]} : vector<32x384xf32> to vector<32x128xf32>
    %6 = vector.shape_cast %5 : vector<32x128xf32> to vector<2x16x128xf32>
    %7 = vector.extract_strided_slice %4 {offsets = [0, 128], sizes = [32, 128], strides = [1, 1]} : vector<32x384xf32> to vector<32x128xf32>
    %8 = vector.shape_cast %7 : vector<32x128xf32> to vector<2x16x128xf32>
    %9 = vector.extract_strided_slice %4 {offsets = [0, 256], sizes = [32, 128], strides = [1, 1]} : vector<32x384xf32> to vector<32x128xf32>
    %10 = vector.shape_cast %9 : vector<32x128xf32> to vector<2x16x128xf32>
    %11 = arith.truncf %6 : vector<2x16x128xf32> to vector<2x16x128xbf16>
    %12 = arith.truncf %8 : vector<2x16x128xf32> to vector<2x16x128xbf16>
    "tpu.trace_start"() <{level = 10 : i32, message = "bqd,bkd->bqk"}> : () -> ()
    %cst_4 = arith.constant dense<0.000000e+00> : vector<2x16x16xf32>
    %13 = tpu.matmul %11, %12, %cst_4 {dimension_numbers = #tpu.dot_dimension_numbers<[2], [2], [1], [1], [0, 0, 0, 1, 1, 1], [0], [0]>} : vector<2x16x128xbf16>, vector<2x16x128xbf16>, vector<2x16x16xf32> -> vector<2x16x16xf32>
    "tpu.trace_stop"() : () -> ()
    %cst_5 = arith.constant 0.0883883461 : f32
    %14 = vector.broadcast %cst_5 : f32 to vector<2x16x16xf32>
    %15 = arith.mulf %13, %14 : vector<2x16x16xf32>
    %c0_6 = arith.constant 0 : index
    %c0_7 = arith.constant 0 : index
    %c0_8 = arith.constant 0 : index
    %16 = vector.load %arg2[%c0_6, %c0_7, %c0_8] : memref<2x1x16xf32, #tpu.memory_space<vmem>>, vector<2x1x16xf32>
    %cst_9 = arith.constant 1.000000e+00 : f32
    %17 = vector.broadcast %cst_9 : f32 to vector<2x1x16xf32>
    %18 = arith.subf %16, %17 : vector<2x1x16xf32>
    %cst_10 = arith.constant 1.000000e+09 : f32
    %19 = vector.broadcast %cst_10 : f32 to vector<2x1x16xf32>
    %20 = arith.mulf %18, %19 : vector<2x1x16xf32>
    %21 = vector.broadcast %20 : vector<2x1x16xf32> to vector<2x16x16xf32>
    %22 = arith.addf %15, %21 : vector<2x16x16xf32>
    %cst_11 = arith.constant dense<0xFF800000> : vector<2x16xf32>
    %23 = vector.multi_reduction <maximumf>, %22, %cst_11 [2] : vector<2x16x16xf32> to vector<2x16xf32>
    %24 = vector.shape_cast %23 : vector<2x16xf32> to vector<2x16x1xf32>
    %25 = vector.broadcast %24 : vector<2x16x1xf32> to vector<2x16x16xf32>
    %26 = arith.subf %22, %25 : vector<2x16x16xf32>
    %27 = math.exp %26 : vector<2x16x16xf32>
    %cst_12 = arith.constant dense<0.000000e+00> : vector<2x16xf32>
    %28 = vector.multi_reduction <add>, %27, %cst_12 [2] : vector<2x16x16xf32> to vector<2x16xf32>
    %29 = vector.shape_cast %28 : vector<2x16xf32> to vector<2x16x1xf32>
    %30 = tpu.reciprocal %29 {approx = true} : vector<2x16x1xf32> -> vector<2x16x1xf32>
    %31 = vector.broadcast %30 : vector<2x16x1xf32> to vector<2x16x16xf32>
    %32 = arith.mulf %27, %31 : vector<2x16x16xf32>
    %33 = arith.truncf %32 : vector<2x16x16xf32> to vector<2x16x16xbf16>
    %34 = arith.truncf %10 : vector<2x16x128xf32> to vector<2x16x128xbf16>
    "tpu.trace_start"() <{level = 10 : i32, message = "bqk,bkd->bqd"}> : () -> ()
    %cst_13 = arith.constant dense<0.000000e+00> : vector<2x16x128xf32>
    %35 = tpu.matmul %33, %34, %cst_13 {dimension_numbers = #tpu.dot_dimension_numbers<[2], [1], [1], [2], [0, 0, 0, 1, 1, 2], [0], [0]>} : vector<2x16x16xbf16>, vector<2x16x128xbf16>, vector<2x16x128xf32> -> vector<2x16x128xf32>
    "tpu.trace_stop"() : () -> ()
    %36 = vector.shape_cast %35 : vector<2x16x128xf32> to vector<32x128xf32>
    %37 = arith.truncf %36 : vector<32x128xf32> to vector<32x128xbf16>
    %c0_14 = arith.constant 0 : index
    %c0_15 = arith.constant 0 : index
    %38 = vector.load %arg4[%c0_14, %c0_15] : memref<128x128xbf16, #tpu.memory_space<vmem>>, vector<128x128xbf16>
    %cst_16 = arith.constant dense<0.000000e+00> : vector<32x128xf32>
    %39 = tpu.matmul %37, %38, %cst_16 {dimension_numbers = #tpu.dot_dimension_numbers<[1], [0], [0], [1], [0, 0, 1, 1], [], []>} : vector<32x128xbf16>, vector<128x128xbf16>, vector<32x128xf32> -> vector<32x128xf32>
    %40 = arith.addf %1, %39 : vector<32x128xf32>
    %cst_17 = arith.constant dense<0.000000e+00> : vector<32xf32>
    %41 = vector.multi_reduction <add>, %40, %cst_17 [1] : vector<32x128xf32> to vector<32xf32>
    %42 = vector.shape_cast %41 : vector<32xf32> to vector<32x1xf32>
    %cst_18 = arith.constant 1.280000e+02 : f32
    %43 = vector.broadcast %cst_18 : f32 to vector<32x1xf32>
    %44 = arith.divf %42, %43 : vector<32x1xf32>
    %45 = vector.broadcast %44 : vector<32x1xf32> to vector<32x128xf32>
    %46 = arith.subf %40, %45 : vector<32x128xf32>
    %47 = arith.mulf %46, %46 : vector<32x128xf32>
    %cst_19 = arith.constant dense<0.000000e+00> : vector<32xf32>
    %48 = vector.multi_reduction <add>, %47, %cst_19 [1] : vector<32x128xf32> to vector<32xf32>
    %49 = vector.shape_cast %48 : vector<32xf32> to vector<32x1xf32>
    %cst_20 = arith.constant 1.280000e+02 : f32
    %50 = vector.broadcast %cst_20 : f32 to vector<32x1xf32>
    %51 = arith.divf %49, %50 : vector<32x1xf32>
    %52 = vector.broadcast %44 : vector<32x1xf32> to vector<32x128xf32>
    %53 = arith.subf %40, %52 : vector<32x128xf32>
    %cst_21 = arith.constant 9.99999974E-6 : f32
    %54 = vector.broadcast %cst_21 : f32 to vector<32x1xf32>
    %55 = arith.addf %51, %54 : vector<32x1xf32>
    %56 = math.rsqrt %55 : vector<32x1xf32>
    %57 = vector.broadcast %56 : vector<32x1xf32> to vector<32x128xf32>
    %58 = arith.mulf %53, %57 : vector<32x128xf32>
    %c0_22 = arith.constant 0 : index
    %c0_23 = arith.constant 0 : index
    %59 = vector.load %arg5[%c0_22, %c0_23] : memref<1x128xf32, #tpu.memory_space<vmem>>, vector<1x128xf32>
    %60 = vector.broadcast %59 : vector<1x128xf32> to vector<32x128xf32>
    %61 = arith.mulf %58, %60 : vector<32x128xf32>
    %c0_24 = arith.constant 0 : index
    %c0_25 = arith.constant 0 : index
    %62 = vector.load %arg6[%c0_24, %c0_25] : memref<1x128xf32, #tpu.memory_space<vmem>>, vector<1x128xf32>
    %63 = vector.broadcast %62 : vector<1x128xf32> to vector<32x128xf32>
    %64 = arith.addf %61, %63 : vector<32x128xf32>
    %65 = arith.truncf %64 : vector<32x128xf32> to vector<32x128xbf16>
    %c0_26 = arith.constant 0 : index
    %c0_27 = arith.constant 0 : index
    %66 = vector.load %arg7[%c0_26, %c0_27] : memref<128x256xbf16, #tpu.memory_space<vmem>>, vector<128x256xbf16>
    %cst_28 = arith.constant dense<0.000000e+00> : vector<32x256xf32>
    %67 = tpu.matmul %65, %66, %cst_28 {dimension_numbers = #tpu.dot_dimension_numbers<[1], [0], [0], [1], [0, 0, 1, 1], [], []>} : vector<32x128xbf16>, vector<128x256xbf16>, vector<32x256xf32> -> vector<32x256xf32>
    %c0_29 = arith.constant 0 : index
    %c0_30 = arith.constant 0 : index
    %68 = vector.load %arg8[%c0_29, %c0_30] : memref<1x256xf32, #tpu.memory_space<vmem>>, vector<1x256xf32>
    %69 = vector.broadcast %68 : vector<1x256xf32> to vector<32x256xf32>
    %70 = arith.addf %67, %69 : vector<32x256xf32>
    %cst_31 = arith.constant 0.000000e+00 : f32
    %71 = vector.broadcast %cst_31 : f32 to vector<32x256xf32>
    %72 = arith.maximumf %70, %71 : vector<32x256xf32>
    %73 = arith.truncf %72 : vector<32x256xf32> to vector<32x256xbf16>
    %c0_32 = arith.constant 0 : index
    %c0_33 = arith.constant 0 : index
    %74 = vector.load %arg9[%c0_32, %c0_33] : memref<256x128xbf16, #tpu.memory_space<vmem>>, vector<256x128xbf16>
    %cst_34 = arith.constant dense<0.000000e+00> : vector<32x128xf32>
    %75 = tpu.matmul %73, %74, %cst_34 {dimension_numbers = #tpu.dot_dimension_numbers<[1], [0], [0], [1], [0, 0, 1, 1], [], []>} : vector<32x256xbf16>, vector<256x128xbf16>, vector<32x128xf32> -> vector<32x128xf32>
    %c0_35 = arith.constant 0 : index
    %c0_36 = arith.constant 0 : index
    %76 = vector.load %arg10[%c0_35, %c0_36] : memref<1x128xf32, #tpu.memory_space<vmem>>, vector<1x128xf32>
    %77 = vector.broadcast %76 : vector<1x128xf32> to vector<32x128xf32>
    %78 = arith.addf %75, %77 : vector<32x128xf32>
    %79 = arith.addf %64, %78 : vector<32x128xf32>
    %cst_37 = arith.constant dense<0.000000e+00> : vector<32xf32>
    %80 = vector.multi_reduction <add>, %79, %cst_37 [1] : vector<32x128xf32> to vector<32xf32>
    %81 = vector.shape_cast %80 : vector<32xf32> to vector<32x1xf32>
    %cst_38 = arith.constant 1.280000e+02 : f32
    %82 = vector.broadcast %cst_38 : f32 to vector<32x1xf32>
    %83 = arith.divf %81, %82 : vector<32x1xf32>
    %84 = vector.broadcast %83 : vector<32x1xf32> to vector<32x128xf32>
    %85 = arith.subf %79, %84 : vector<32x128xf32>
    %86 = arith.mulf %85, %85 : vector<32x128xf32>
    %cst_39 = arith.constant dense<0.000000e+00> : vector<32xf32>
    %87 = vector.multi_reduction <add>, %86, %cst_39 [1] : vector<32x128xf32> to vector<32xf32>
    %88 = vector.shape_cast %87 : vector<32xf32> to vector<32x1xf32>
    %cst_40 = arith.constant 1.280000e+02 : f32
    %89 = vector.broadcast %cst_40 : f32 to vector<32x1xf32>
    %90 = arith.divf %88, %89 : vector<32x1xf32>
    %91 = vector.broadcast %83 : vector<32x1xf32> to vector<32x128xf32>
    %92 = arith.subf %79, %91 : vector<32x128xf32>
    %cst_41 = arith.constant 9.99999974E-6 : f32
    %93 = vector.broadcast %cst_41 : f32 to vector<32x1xf32>
    %94 = arith.addf %90, %93 : vector<32x1xf32>
    %95 = math.rsqrt %94 : vector<32x1xf32>
    %96 = vector.broadcast %95 : vector<32x1xf32> to vector<32x128xf32>
    %97 = arith.mulf %92, %96 : vector<32x128xf32>
    %c0_42 = arith.constant 0 : index
    %c0_43 = arith.constant 0 : index
    %98 = vector.load %arg11[%c0_42, %c0_43] : memref<1x128xf32, #tpu.memory_space<vmem>>, vector<1x128xf32>
    %99 = vector.broadcast %98 : vector<1x128xf32> to vector<32x128xf32>
    %100 = arith.mulf %97, %99 : vector<32x128xf32>
    %c0_44 = arith.constant 0 : index
    %c0_45 = arith.constant 0 : index
    %101 = vector.load %arg12[%c0_44, %c0_45] : memref<1x128xf32, #tpu.memory_space<vmem>>, vector<1x128xf32>
    %102 = vector.broadcast %101 : vector<1x128xf32> to vector<32x128xf32>
    %103 = arith.addf %100, %102 : vector<32x128xf32>
    %104 = vector.shape_cast %103 : vector<32x128xf32> to vector<2x16x128xf32>
    %105 = vector.extract_strided_slice %104 {offsets = [0, 0, 0], sizes = [2, 1, 128], strides = [1, 1, 1]} : vector<2x16x128xf32> to vector<2x1x128xf32>
    %106 = vector.shape_cast %105 : vector<2x1x128xf32> to vector<2x128xf32>
    %c0_46 = arith.constant 0 : index
    %c0_47 = arith.constant 0 : index
    %c0_48 = arith.constant 0 : index
    %107 = vector.load %arg13[%c0_46, %c0_47, %c0_48] : memref<1x2x128xf32, #tpu.memory_space<vmem>>, vector<1x2x128xf32>
    %108 = vector.shape_cast %107 : vector<1x2x128xf32> to vector<2x128xf32>
    %109 = vector.shape_cast %106 : vector<2x128xf32> to vector<1x2x128xf32>
    tpu.vector_store %arg13[%c0_46, %c0_47, %c0_48], %109 {strides = array<i32>} : memref<1x2x128xf32, #tpu.memory_space<vmem>>, vector<1x2x128xf32>,
    return
  }
  func.func @transform_0(%arg0: i32) -> (i32, i32, i32) {
    %c0_i32 = arith.constant 0 : i32
    %c0_i32_0 = arith.constant 0 : i32
    %c0_i32_1 = arith.constant 0 : i32
    return %arg0, %c0_i32, %c0_i32_0 : i32, i32, i32
  }
  func.func @transform_1(%arg0: i32) -> (i32, i32, i32) {
    %c0_i32 = arith.constant 0 : i32
    %c0_i32_0 = arith.constant 0 : i32
    %c0_i32_1 = arith.constant 0 : i32
    return %arg0, %c0_i32, %c0_i32_0 : i32, i32, i32
  }
  func.func @transform_2(%arg0: i32) -> (i32, i32) {
    %c0_i32 = arith.constant 0 : i32
    %c0_i32_0 = arith.constant 0 : i32
    %c0_i32_1 = arith.constant 0 : i32
    return %c0_i32, %c0_i32_0 : i32, i32
  }
  func.func @transform_3(%arg0: i32) -> (i32, i32) {
    %c0_i32 = arith.constant 0 : i32
    %c0_i32_0 = arith.constant 0 : i32
    %c0_i32_1 = arith.constant 0 : i32
    return %c0_i32, %c0_i32_0 : i32, i32
  }
  func.func @transform_4(%arg0: i32) -> (i32, i32) {
    %c0_i32 = arith.constant 0 : i32
    %c0_i32_0 = arith.constant 0 : i32
    %c0_i32_1 = arith.constant 0 : i32
    return %c0_i32, %c0_i32_0 : i32, i32
  }
  func.func @transform_5(%arg0: i32) -> (i32, i32) {
    %c0_i32 = arith.constant 0 : i32
    %c0_i32_0 = arith.constant 0 : i32
    %c0_i32_1 = arith.constant 0 : i32
    return %c0_i32, %c0_i32_0 : i32, i32
  }
  func.func @transform_6(%arg0: i32) -> (i32, i32) {
    %c0_i32 = arith.constant 0 : i32
    %c0_i32_0 = arith.constant 0 : i32
    %c0_i32_1 = arith.constant 0 : i32
    return %c0_i32, %c0_i32_0 : i32, i32
  }
  func.func @transform_7(%arg0: i32) -> (i32, i32) {
    %c0_i32 = arith.constant 0 : i32
    %c0_i32_0 = arith.constant 0 : i32
    %c0_i32_1 = arith.constant 0 : i32
    return %c0_i32, %c0_i32_0 : i32, i32
  }
  func.func @transform_8(%arg0: i32) -> (i32, i32) {
    %c0_i32 = arith.constant 0 : i32
    %c0_i32_0 = arith.constant 0 : i32
    %c0_i32_1 = arith.constant 0 : i32
    return %c0_i32, %c0_i32_0 : i32, i32
  }
  func.func @transform_9(%arg0: i32) -> (i32, i32) {
    %c0_i32 = arith.constant 0 : i32
    %c0_i32_0 = arith.constant 0 : i32
    %c0_i32_1 = arith.constant 0 : i32
    return %c0_i32, %c0_i32_0 : i32, i32
  }
  func.func @transform_10(%arg0: i32) -> (i32, i32) {
    %c0_i32 = arith.constant 0 : i32
    %c0_i32_0 = arith.constant 0 : i32
    %c0_i32_1 = arith.constant 0 : i32
    return %c0_i32, %c0_i32_0 : i32, i32
  }
  func.func @transform_11(%arg0: i32) -> (i32, i32) {
    %c0_i32 = arith.constant 0 : i32
    %c0_i32_0 = arith.constant 0 : i32
    %c0_i32_1 = arith.constant 0 : i32
    return %c0_i32, %c0_i32_0 : i32, i32
  }
  func.func @transform_12(%arg0: i32) -> (i32, i32, i32) {
    %c0_i32 = arith.constant 0 : i32
    %c0_i32_0 = arith.constant 0 : i32
    %c0_i32_1 = arith.constant 0 : i32
    return %arg0, %c0_i32, %c0_i32_0 : i32, i32, i32
  }
}

</mosaic_0001>

<llo_original>
// kernel: tpu_custom_call.1
$region0: #{tpu_custom_call.1}
  #allocation0 [shape = 'u32[]', space=smem, size = 0x4, offset = 0x4, fixed_abs, tag = 'smem constant byte address 0x4 - core index']
  #allocation1 [shape = 'u32[144,128]{1,0:T(1,128)}', space=vmem, size = 0x12000, scoped, tag = 'internal scratch']
  %s0 = inlined_call_operand.hbm [shape: f32[4,16,128], index: 0, kind: input, shape index: {}]
  %s1 = inlined_call_operand.hbm [shape: f32[4,1,16], index: 1, kind: input, shape index: {}]
  %s2 = inlined_call_operand.hbm [shape: bf16[128,384], index: 2, kind: input, shape index: {}]
  %s3 = inlined_call_operand.hbm [shape: bf16[128,128], index: 3, kind: input, shape index: {}]
  %s4 = inlined_call_operand.vmem [shape: f32[1,128], index: 4, kind: input, shape index: {}]
  %s5 = inlined_call_operand.vmem [shape: f32[1,128], index: 5, kind: input, shape index: {}]
  %s6 = inlined_call_operand.hbm [shape: bf16[128,256], index: 6, kind: input, shape index: {}]
  %s7 = inlined_call_operand.vmem [shape: f32[1,256], index: 7, kind: input, shape index: {}]
  %s8 = inlined_call_operand.hbm [shape: bf16[256,128], index: 8, kind: input, shape index: {}]
  %s9 = inlined_call_operand.vmem [shape: f32[1,128], index: 9, kind: input, shape index: {}]
  %s10 = inlined_call_operand.vmem [shape: f32[1,128], index: 10, kind: input, shape index: {}]
  %s11 = inlined_call_operand.vmem [shape: f32[1,128], index: 11, kind: input, shape index: {}]
  %s12 = inlined_call_operand.hbm [shape: f32[2,2,128], index: 12, kind: output, shape index: {}]
  %s13 = sld [smem:[#allocation0]]
  $region105: #{tpu_custom_call.1} parent=0
    _
  %s15 = ssub.s32 1, %s13
  %s16 = scalar_select 0, %s15, %s13
  $region1: #{tpu_custom_call.1} parent=0
    #allocation2 [shape = 'u8[32768]{0}', space=vmem, size = 0x8000, scoped, tag = 'input window, operand 0']
    #allocation3 [shape = 's32[2]{0}', space=sflag, size = 0x8, scoped, tag = 'scoped memory for tpu_custom_call.1']
    #allocation4 [shape = 's32[2]{0}', space=sflag, size = 0x8, scoped, tag = 'scoped memory for tpu_custom_call.1']
    #allocation5 [shape = 'u8[2048]{0}', space=vmem, size = 0x800, scoped, tag = 'input window, operand 1']
    #allocation6 [shape = 's32[2]{0}', space=sflag, size = 0x8, scoped, tag = 'scoped memory for tpu_custom_call.1']
    #allocation7 [shape = 'u8[98304]{0}', space=vmem, size = 0x18000, scoped, tag = 'input window, operand 2, single buffered']
    #allocation8 [shape = 'u8[32768]{0}', space=vmem, size = 0x8000, scoped, tag = 'input window, operand 3, single buffered']
    #allocation9 [shape = 's32[1]{0}', space=sflag, size = 0x4, scoped, tag = 'scoped memory for tpu_custom_call.1']
    #allocation10 [shape = 'u8[65536]{0}', space=vmem, size = 0x10000, scoped, tag = 'input window, operand 6, single buffered']
    #allocation11 [shape = 'u8[65536]{0}', space=vmem, size = 0x10000, scoped, tag = 'input window, operand 8, single buffered']
    #allocation12 [shape = 's32[1]{0}', space=sflag, size = 0x4, scoped, tag = 'scoped memory for tpu_custom_call.1']
    #allocation13 [shape = 'u8[2048]{0}', space=vmem, size = 0x800, scoped, tag = 'output window, operand 0']
    %17 = vsyncpa [#allocation3], 0
    %s18 = scalar_lea.sflag [#allocation3], 1
    %19 = vsyncpa %s18, 0
    %20 = vsyncpa [#allocation6], 0
    %s21 = scalar_lea.sflag [#allocation6], 1
    %22 = vsyncpa %s21, 0
    %23 = vsyncpa [#allocation9], 0
    %24 = vsyncpa [#allocation12], 0
    %25 = vsyncpa [#allocation4], 0
    %s26 = scalar_lea.sflag [#allocation4], 1
    %27 = vsyncpa %s26, 0
    loop: start=0, step=1, limit=4
    $region2: #{tpu_custom_call.1} parent=1 // loop_pre_header
      _
    $region3: #{tpu_custom_call.1} parent=1 // loop_header
      %s29 = sphi 0, %s33
      %p30 = scmp.ge.s32.totalorder %s29, 4
      %s39 = sphi 0, %s41
      %s42 = sphi 0, %s39
      %s43 = sphi 0, %s42
      %s59 = sphi 0, %s43
      %s65 = sphi 0, %s67
      %s68 = sphi 0, %s65
      %s69 = sphi 0, %s68
      %s85 = sphi 0, %s69
      %s89 = sphi 0, %s89
      %s91 = sphi 0, %s89
      %s92 = sphi 0, %s91
      %s106 = sphi 0, %s92
      %s110 = sphi 0, %s110
      %s112 = sphi 0, %s110
      %s113 = sphi 0, %s112
      %s127 = sphi 0, %s113
      %s131 = sphi 0, %s131
      %s133 = sphi 0, %s131
      %s134 = sphi 0, %s133
      %s148 = sphi 0, %s134
      %s152 = sphi 0, %s152
      %s154 = sphi 0, %s152
      %s155 = sphi 0, %s154
      %s169 = sphi 0, %s155
      %s173 = sphi 0, %s173
      %s175 = sphi 0, %s173
      %s176 = sphi 0, %s175
      %s190 = sphi 0, %s176
      %s194 = sphi 0, %s194
      %s196 = sphi 0, %s194
      %s197 = sphi 0, %s196
      %s211 = sphi 0, %s197
      %s215 = sphi 0, %s215
      %s217 = sphi 0, %s215
      %s218 = sphi 0, %s217
      %s232 = sphi 0, %s218
      %s236 = sphi 0, %s236
      %s238 = sphi 0, %s236
      %s239 = sphi 0, %s238
      %s253 = sphi 0, %s239
      %s257 = sphi 0, %s257
      %s259 = sphi 0, %s257
      %s260 = sphi 0, %s259
      %s274 = sphi 0, %s260
      %s278 = sphi 0, %s278
      %s280 = sphi 0, %s278
      %s281 = sphi 0, %s280
      %s295 = sphi 0, %s281
      %s301 = sphi 0, %s303
      %s304 = sphi 0, %s301
      %s305 = sphi 0, %s304
      %s321 = sphi 0, %s305
    $region4: #{tpu_custom_call.1} parent=1 // loop_header_branch
      %32 = sbr.rel (%p30) target = $region8
    $region5: #{tpu_custom_call.1} parent=1 // loop_body
      %s34 = ssub.s32 %s29, 1
      %s35 = ssub.s32 %s29, 2
      %s36 = sadd.s32 %s29, 1
      %s37 = ssub.s32 %s29, %s36
      %p38 = scmp.eq.s32.totalorder %s37, 0
      %s40 = sadd.s32 %s39, 1
      %s41 = scalar_select %p38, %s39, %s40
      %p44 = pneg %p38
      %p45 = scmp.eq.s32.totalorder %s29, 1
      %p46 = por %p44, %p45
      %p47 = scmp.ne.s32.totalorder %s39, %s42
      %p48 = scmp.eq.s32.totalorder %s29, 0
      %p49 = por %p47, %p48
      %p50 = scmp.ne.s32.totalorder %s39, %s42
      %p51 = scmp.eq.s32.totalorder %s34, 1
      %p52 = por %p50, %p51
      %p53 = scmp.ne.s32.totalorder %s42, %s43
      %p54 = scmp.eq.s32.totalorder %s34, 0
      %p55 = por %p53, %p54
      %p56 = scmp.ne.s32.totalorder %s42, %s43
      %p57 = scmp.eq.s32.totalorder %s35, 1
      %p58 = por %p56, %p57
      %p60 = scmp.ne.s32.totalorder %s43, %s59
      %p61 = scmp.eq.s32.totalorder %s35, 0
      %p62 = por %p60, %p61
      %s63 = ssub.s32 %s29, %s36
      %p64 = scmp.eq.s32.totalorder %s63, 0
      %s66 = sadd.s32 %s65, 1
      %s67 = scalar_select %p64, %s65, %s66
      %p70 = pneg %p64
      %p71 = scmp.eq.s32.totalorder %s29, 1
      %p72 = por %p70, %p71
      %p73 = scmp.ne.s32.totalorder %s65, %s68
      %p74 = scmp.eq.s32.totalorder %s29, 0
      %p75 = por %p73, %p74
      %p76 = scmp.ne.s32.totalorder %s65, %s68
      %p77 = scmp.eq.s32.totalorder %s34, 1
      %p78 = por %p76, %p77
      %p79 = scmp.ne.s32.totalorder %s68, %s69
      %p80 = scmp.eq.s32.totalorder %s34, 0
      %p81 = por %p79, %p80
      %p82 = scmp.ne.s32.totalorder %s68, %s69
      %p83 = scmp.eq.s32.totalorder %s35, 1
      %p84 = por %p82, %p83
      %p86 = scmp.ne.s32.totalorder %s69, %s85
      %p87 = scmp.eq.s32.totalorder %s35, 0
      %p88 = por %p86, %p87
      %s90 = sadd.s32 %s89, 1
      %p93 = scmp.eq.s32.totalorder %s29, 1
      %p94 = scmp.ne.s32.totalorder %s89, %s91
      %p95 = scmp.eq.s32.totalorder %s29, 0
      %p96 = por %p94, %p95
      %p97 = scmp.ne.s32.totalorder %s89, %s91
      %p98 = scmp.eq.s32.totalorder %s34, 1
      %p99 = por %p97, %p98
      %p100 = scmp.ne.s32.totalorder %s91, %s92
      %p101 = scmp.eq.s32.totalorder %s34, 0
      %p102 = por %p100, %p101
      %p103 = scmp.ne.s32.totalorder %s91, %s92
      %p104 = scmp.eq.s32.totalorder %s35, 1
      %p105 = por %p103, %p104
      %p107 = scmp.ne.s32.totalorder %s92, %s106
      %p108 = scmp.eq.s32.totalorder %s35, 0
      %p109 = por %p107, %p108
      %s111 = sadd.s32 %s110, 1
      %p114 = scmp.eq.s32.totalorder %s29, 1
      %p115 = scmp.ne.s32.totalorder %s110, %s112
      %p116 = scmp.eq.s32.totalorder %s29, 0
      %p117 = por %p115, %p116
      %p118 = scmp.ne.s32.totalorder %s110, %s112
      %p119 = scmp.eq.s32.totalorder %s34, 1
      %p120 = por %p118, %p119
      %p121 = scmp.ne.s32.totalorder %s112, %s113
      %p122 = scmp.eq.s32.totalorder %s34, 0
      %p123 = por %p121, %p122
      %p124 = scmp.ne.s32.totalorder %s112, %s113
      %p125 = scmp.eq.s32.totalorder %s35, 1
      %p126 = por %p124, %p125
      %p128 = scmp.ne.s32.totalorder %s113, %s127
      %p129 = scmp.eq.s32.totalorder %s35, 0
      %p130 = por %p128, %p129
      %s132 = sadd.s32 %s131, 1
      %p135 = scmp.eq.s32.totalorder %s29, 1
      %p136 = scmp.ne.s32.totalorder %s131, %s133
      %p137 = scmp.eq.s32.totalorder %s29, 0
      %p138 = por %p136, %p137
      %p139 = scmp.ne.s32.totalorder %s131, %s133
      %p140 = scmp.eq.s32.totalorder %s34, 1
      %p141 = por %p139, %p140
      %p142 = scmp.ne.s32.totalorder %s133, %s134
      %p143 = scmp.eq.s32.totalorder %s34, 0
      %p144 = por %p142, %p143
      %p145 = scmp.ne.s32.totalorder %s133, %s134
      %p146 = scmp.eq.s32.totalorder %s35, 1
      %p147 = por %p145, %p146
      %p149 = scmp.ne.s32.totalorder %s134, %s148
      %p150 = scmp.eq.s32.totalorder %s35, 0
      %p151 = por %p149, %p150
      %s153 = sadd.s32 %s152, 1
      %p156 = scmp.eq.s32.totalorder %s29, 1
      %p157 = scmp.ne.s32.totalorder %s152, %s154
      %p158 = scmp.eq.s32.totalorder %s29, 0
      %p159 = por %p157, %p158
      %p160 = scmp.ne.s32.totalorder %s152, %s154
      %p161 = scmp.eq.s32.totalorder %s34, 1
      %p162 = por %p160, %p161
      %p163 = scmp.ne.s32.totalorder %s154, %s155
      %p164 = scmp.eq.s32.totalorder %s34, 0
      %p165 = por %p163, %p164
      %p166 = scmp.ne.s32.totalorder %s154, %s155
      %p167 = scmp.eq.s32.totalorder %s35, 1
      %p168 = por %p166, %p167
      %p170 = scmp.ne.s32.totalorder %s155, %s169
      %p171 = scmp.eq.s32.totalorder %s35, 0
      %p172 = por %p170, %p171
      %s174 = sadd.s32 %s173, 1
      %p177 = scmp.eq.s32.totalorder %s29, 1
      %p178 = scmp.ne.s32.totalorder %s173, %s175
      %p179 = scmp.eq.s32.totalorder %s29, 0
      %p180 = por %p178, %p179
      %p181 = scmp.ne.s32.totalorder %s173, %s175
      %p182 = scmp.eq.s32.totalorder %s34, 1
      %p183 = por %p181, %p182
      %p184 = scmp.ne.s32.totalorder %s175, %s176
      %p185 = scmp.eq.s32.totalorder %s34, 0
      %p186 = por %p184, %p185
      %p187 = scmp.ne.s32.totalorder %s175, %s176
      %p188 = scmp.eq.s32.totalorder %s35, 1
      %p189 = por %p187, %p188
      %p191 = scmp.ne.s32.totalorder %s176, %s190
      %p192 = scmp.eq.s32.totalorder %s35, 0
      %p193 = por %p191, %p192
      %s195 = sadd.s32 %s194, 1
      %p198 = scmp.eq.s32.totalorder %s29, 1
      %p199 = scmp.ne.s32.totalorder %s194, %s196
      %p200 = scmp.eq.s32.totalorder %s29, 0
      %p201 = por %p199, %p200
      %p202 = scmp.ne.s32.totalorder %s194, %s196
      %p203 = scmp.eq.s32.totalorder %s34, 1
      %p204 = por %p202, %p203
      %p205 = scmp.ne.s32.totalorder %s196, %s197
      %p206 = scmp.eq.s32.totalorder %s34, 0
      %p207 = por %p205, %p206
      %p208 = scmp.ne.s32.totalorder %s196, %s197
      %p209 = scmp.eq.s32.totalorder %s35, 1
      %p210 = por %p208, %p209
      %p212 = scmp.ne.s32.totalorder %s197, %s211
      %p213 = scmp.eq.s32.totalorder %s35, 0
      %p214 = por %p212, %p213
      %s216 = sadd.s32 %s215, 1
      %p219 = scmp.eq.s32.totalorder %s29, 1
      %p220 = scmp.ne.s32.totalorder %s215, %s217
      %p221 = scmp.eq.s32.totalorder %s29, 0
      %p222 = por %p220, %p221
      %p223 = scmp.ne.s32.totalorder %s215, %s217
      %p224 = scmp.eq.s32.totalorder %s34, 1
      %p225 = por %p223, %p224
      %p226 = scmp.ne.s32.totalorder %s217, %s218
      %p227 = scmp.eq.s32.totalorder %s34, 0
      %p228 = por %p226, %p227
      %p229 = scmp.ne.s32.totalorder %s217, %s218
      %p230 = scmp.eq.s32.totalorder %s35, 1
      %p231 = por %p229, %p230
      %p233 = scmp.ne.s32.totalorder %s218, %s232
      %p234 = scmp.eq.s32.totalorder %s35, 0
      %p235 = por %p233, %p234
      %s237 = sadd.s32 %s236, 1
      %p240 = scmp.eq.s32.totalorder %s29, 1
      %p241 = scmp.ne.s32.totalorder %s236, %s238
      %p242 = scmp.eq.s32.totalorder %s29, 0
      %p243 = por %p241, %p242
      %p244 = scmp.ne.s32.totalorder %s236, %s238
      %p245 = scmp.eq.s32.totalorder %s34, 1
      %p246 = por %p244, %p245
      %p247 = scmp.ne.s32.totalorder %s238, %s239
      %p248 = scmp.eq.s32.totalorder %s34, 0
      %p249 = por %p247, %p248
      %p250 = scmp.ne.s32.totalorder %s238, %s239
      %p251 = scmp.eq.s32.totalorder %s35, 1
      %p252 = por %p250, %p251
      %p254 = scmp.ne.s32.totalorder %s239, %s253
      %p255 = scmp.eq.s32.totalorder %s35, 0
      %p256 = por %p254, %p255
      %s258 = sadd.s32 %s257, 1
      %p261 = scmp.eq.s32.totalorder %s29, 1
      %p262 = scmp.ne.s32.totalorder %s257, %s259
      %p263 = scmp.eq.s32.totalorder %s29, 0
      %p264 = por %p262, %p263
      %p265 = scmp.ne.s32.totalorder %s257, %s259
      %p266 = scmp.eq.s32.totalorder %s34, 1
      %p267 = por %p265, %p266
      %p268 = scmp.ne.s32.totalorder %s259, %s260
      %p269 = scmp.eq.s32.totalorder %s34, 0
      %p270 = por %p268, %p269
      %p271 = scmp.ne.s32.totalorder %s259, %s260
      %p272 = scmp.eq.s32.totalorder %s35, 1
      %p273 = por %p271, %p272
      %p275 = scmp.ne.s32.totalorder %s260, %s274
      %p276 = scmp.eq.s32.totalorder %s35, 0
      %p277 = por %p275, %p276
      %s279 = sadd.s32 %s278, 1
      %p282 = scmp.eq.s32.totalorder %s29, 1
      %p283 = scmp.ne.s32.totalorder %s278, %s280
      %p284 = scmp.eq.s32.totalorder %s29, 0
      %p285 = por %p283, %p284
      %p286 = scmp.ne.s32.totalorder %s278, %s280
      %p287 = scmp.eq.s32.totalorder %s34, 1
      %p288 = por %p286, %p287
      %p289 = scmp.ne.s32.totalorder %s280, %s281
      %p290 = scmp.eq.s32.totalorder %s34, 0
      %p291 = por %p289, %p290
      %p292 = scmp.ne.s32.totalorder %s280, %s281
      %p293 = scmp.eq.s32.totalorder %s35, 1
      %p294 = por %p292, %p293
      %p296 = scmp.ne.s32.totalorder %s281, %s295
      %p297 = scmp.eq.s32.totalorder %s35, 0
      %p298 = por %p296, %p297
      %s299 = ssub.s32 %s29, %s36
      %p300 = scmp.eq.s32.totalorder %s299, 0
      %s302 = sadd.s32 %s301, 1
      %s303 = scalar_select %p300, %s301, %s302
      %p306 = pneg %p300
      %p307 = scmp.eq.s32.totalorder %s29, 1
      %p308 = por %p306, %p307
      %p309 = scmp.ne.s32.totalorder %s301, %s304
      %p310 = scmp.eq.s32.totalorder %s29, 0
      %p311 = por %p309, %p310
      %p312 = scmp.ne.s32.totalorder %s301, %s304
      %p313 = scmp.eq.s32.totalorder %s34, 1
      %p314 = por %p312, %p313
      %p315 = scmp.ne.s32.totalorder %s304, %s305
      %p316 = scmp.eq.s32.totalorder %s34, 0
      %p317 = por %p315, %p316
      %p318 = scmp.ne.s32.totalorder %s304, %s305
      %p319 = scmp.eq.s32.totalorder %s35, 1
      %p320 = por %p318, %p319
      %p322 = scmp.ne.s32.totalorder %s305, %s321
      %p323 = scmp.eq.s32.totalorder %s35, 0
      %p324 = por %p322, %p323
      %p325 = scmp.le.s32.totalorder 1, %s29
      %p326 = scmp.lt.s32.totalorder %s29, 3
      %p327 = pnand %p325, %p326
      %p328 = pneg %p327
      // Predicated region
      $region9: #{tpu_custom_call.1} parent=5 // pred_check
        _
      $region10: #{tpu_custom_call.1} parent=5 // pred_check_branch
        %330 = sbr.rel (%p327) target = $region12
      $region11: #{tpu_custom_call.1} parent=5 // pred_region
        %s331 = ssub.s32 %s29, 1
        // Predicated region
        $region13: #{tpu_custom_call.1} parent=11 // pred_check
          %p332 = pneg %p102
        $region14: #{tpu_custom_call.1} parent=11 // pred_check_branch
          %334 = sbr.rel (%p332) target = $region16
        $region15: #{tpu_custom_call.1} parent=11 // pred_region
          %s336 = ssub.s32 3072, 3072
          %337 = vsyncadd [#allocation6], %s336
          %s338 = sshll.u32 [#allocation7], 4
          %s339 = int_to_ptr.vmem [resolvable:$true] %s338
          %344 = dma.hbm_to_vmem [thread:$0]  %s2, 3072, %s339, [#allocation6], 192, 192, 12
        $region16: #{tpu_custom_call.1} parent=11 // pred_fallthru
          _
        // Predicated region
        $region17: #{tpu_custom_call.1} parent=11 // pred_check
          %p345 = pneg %p123
        $region18: #{tpu_custom_call.1} parent=11 // pred_check_branch
          %347 = sbr.rel (%p345) target = $region20
        $region19: #{tpu_custom_call.1} parent=11 // pred_region
          %s349 = ssub.s32 1024, 1024
          %350 = vsyncadd [#allocation9], %s349
          %s351 = sshll.u32 [#allocation8], 4
          %s352 = int_to_ptr.vmem [resolvable:$true] %s351
          %357 = dma.hbm_to_vmem [thread:$0]  %s3, 1024, %s352, [#allocation9], 64, 64, 4
        $region20: #{tpu_custom_call.1} parent=11 // pred_fallthru
          _
        // Predicated region
        $region21: #{tpu_custom_call.1} parent=11 // pred_check
          %p358 = pneg %p144
        $region22: #{tpu_custom_call.1} parent=11 // pred_check_branch
          %360 = sbr.rel (%p358) target = $region24
        $region23: #{tpu_custom_call.1} parent=11 // pred_region
          _
        $region24: #{tpu_custom_call.1} parent=11 // pred_fallthru
          _
        // Predicated region
        $region25: #{tpu_custom_call.1} parent=11 // pred_check
          %p361 = pneg %p165
        $region26: #{tpu_custom_call.1} parent=11 // pred_check_branch
          %363 = sbr.rel (%p361) target = $region28
        $region27: #{tpu_custom_call.1} parent=11 // pred_region
          _
        $region28: #{tpu_custom_call.1} parent=11 // pred_fallthru
          _
        // Predicated region
        $region29: #{tpu_custom_call.1} parent=11 // pred_check
          %p364 = pneg %p186
        $region30: #{tpu_custom_call.1} parent=11 // pred_check_branch
          %366 = sbr.rel (%p364) target = $region32
        $region31: #{tpu_custom_call.1} parent=11 // pred_region
          %s368 = ssub.s32 2048, 2048
          %369 = vsyncadd [#allocation9], %s368
          %s370 = sshll.u32 [#allocation10], 4
          %s371 = int_to_ptr.vmem [resolvable:$true] %s370
          %376 = dma.hbm_to_vmem [thread:$0]  %s6, 2048, %s371, [#allocation9], 128, 128, 8
        $region32: #{tpu_custom_call.1} parent=11 // pred_fallthru
          _
        // Predicated region
        $region33: #{tpu_custom_call.1} parent=11 // pred_check
          %p377 = pneg %p207
        $region34: #{tpu_custom_call.1} parent=11 // pred_check_branch
          %379 = sbr.rel (%p377) target = $region36
        $region35: #{tpu_custom_call.1} parent=11 // pred_region
          _
        $region36: #{tpu_custom_call.1} parent=11 // pred_fallthru
          _
        // Predicated region
        $region37: #{tpu_custom_call.1} parent=11 // pred_check
          %p380 = pneg %p228
        $region38: #{tpu_custom_call.1} parent=11 // pred_check_branch
          %382 = sbr.rel (%p380) target = $region40
        $region39: #{tpu_custom_call.1} parent=11 // pred_region
          %s384 = ssub.s32 2048, 2048
          %385 = vsyncadd [#allocation12], %s384
          %s386 = sshll.u32 [#allocation11], 4
          %s387 = int_to_ptr.vmem [resolvable:$true] %s386
          %392 = dma.hbm_to_vmem [thread:$0]  %s8, 2048, %s387, [#allocation12], 64, 64, 4
        $region40: #{tpu_custom_call.1} parent=11 // pred_fallthru
          _
        // Predicated region
        $region41: #{tpu_custom_call.1} parent=11 // pred_check
          %p393 = pneg %p249
        $region42: #{tpu_custom_call.1} parent=11 // pred_check_branch
          %395 = sbr.rel (%p393) target = $region44
        $region43: #{tpu_custom_call.1} parent=11 // pred_region
          _
        $region44: #{tpu_custom_call.1} parent=11 // pred_fallthru
          _
        // Predicated region
        $region45: #{tpu_custom_call.1} parent=11 // pred_check
          %p396 = pneg %p270
        $region46: #{tpu_custom_call.1} parent=11 // pred_check_branch
          %398 = sbr.rel (%p396) target = $region48
        $region47: #{tpu_custom_call.1} parent=11 // pred_region
          _
        $region48: #{tpu_custom_call.1} parent=11 // pred_fallthru
          _
        // Predicated region
        $region49: #{tpu_custom_call.1} parent=11 // pred_check
          %p399 = pneg %p291
        $region50: #{tpu_custom_call.1} parent=11 // pred_check_branch
          %401 = sbr.rel (%p399) target = $region52
        $region51: #{tpu_custom_call.1} parent=11 // pred_region
          _
        $region52: #{tpu_custom_call.1} parent=11 // pred_fallthru
          _
      $region12: #{tpu_custom_call.1} parent=5 // pred_fallthru
        _
      %p402 = scmp.lt.s32.totalorder %s29, 2
      // Predicated region
      $region53: #{tpu_custom_call.1} parent=5 // pred_check
        %p403 = pneg %p402
      $region54: #{tpu_custom_call.1} parent=5 // pred_check_branch
        %405 = sbr.rel (%p403) target = $region56
      $region55: #{tpu_custom_call.1} parent=5 // pred_region
        // Predicated region
        $region57: #{tpu_custom_call.1} parent=55 // pred_check
          %p406 = pneg %p49
        $region58: #{tpu_custom_call.1} parent=55 // pred_check_branch
          %408 = sbr.rel (%p406) target = $region60
        $region59: #{tpu_custom_call.1} parent=55 // pred_region
          %s409 = sand.u32 %s39, 1
          %s410 = scalar_lea.sflag [#allocation3], %s409
          %s411 = sand.u32 %s39, 1
          %s412 = smul.addr %s411, 32
          %s413 = scalar_lea.vmem [#allocation2], %s412
          %s414 = smul.u32 2, %s29
          %s416 = ssub.s32 512, 512
          %417 = vsyncadd %s410, %s416
          %s418 = smul.addr %s414, 2
          %s419 = smul.addr %s418, 128
          %s420 = scalar_lea.hbm %s0, %s419
          %s421 = sshll.u32 %s413, 4
          %s422 = int_to_ptr.vmem [resolvable:$true] %s421
          %427 = dma.hbm_to_vmem [thread:$0]  %s420, 512, %s422, %s410, 128, 128, 8
        $region60: #{tpu_custom_call.1} parent=55 // pred_fallthru
          _
        // Predicated region
        $region61: #{tpu_custom_call.1} parent=55 // pred_check
          %p428 = pneg %p75
        $region62: #{tpu_custom_call.1} parent=55 // pred_check_branch
          %430 = sbr.rel (%p428) target = $region64
        $region63: #{tpu_custom_call.1} parent=55 // pred_region
          %s431 = sand.u32 %s29, 1
          %s432 = scalar_lea.sflag [#allocation6], %s431
          %s433 = sand.u32 %s65, 1
          %s434 = smul.addr %s433, 2
          %s435 = scalar_lea.vmem [#allocation5], %s434
          %s436 = smul.u32 2, %s29
          %s438 = ssub.s32 32, 32
          %439 = vsyncadd %s432, %s438
          %s440 = smul.addr %s436, 16
          %s441 = scalar_lea.hbm %s1, %s440
          %s442 = sshll.u32 %s435, 4
          %s443 = int_to_ptr.vmem [resolvable:$true] %s442
          %448 = dma.hbm_to_vmem [thread:$0]  %s441, 32, %s443, %s432, 16, 16, 1
        $region64: #{tpu_custom_call.1} parent=55 // pred_fallthru
          _
      $region56: #{tpu_custom_call.1} parent=5 // pred_fallthru
        _
      %p449 = scmp.le.s32.totalorder 1, %s29
      %p450 = scmp.lt.s32.totalorder %s29, 3
      %p451 = pnand %p449, %p450
      %p452 = pneg %p451
      // Predicated region
      $region65: #{tpu_custom_call.1} parent=5 // pred_check
        _
      $region66: #{tpu_custom_call.1} parent=5 // pred_check_branch
        %454 = sbr.rel (%p451) target = $region68
      $region67: #{tpu_custom_call.1} parent=5 // pred_region
        %s455 = ssub.s32 %s29, 1
        %s456 = sand.u32 %s42, 1
        %s457 = scalar_lea.sflag [#allocation3], %s456
        %s458 = sand.u32 %s42, 1
        %s459 = smul.addr %s458, 32
        %s460 = scalar_lea.vmem [#allocation2], %s459
        // Predicated region
        $region69: #{tpu_custom_call.1} parent=67 // pred_check
          %p461 = pneg %p55
        $region70: #{tpu_custom_call.1} parent=67 // pred_check_branch
          %463 = sbr.rel (%p461) target = $region72
        $region71: #{tpu_custom_call.1} parent=67 // pred_region
          %464 = dma.done %s457, 512
        $region72: #{tpu_custom_call.1} parent=67 // pred_fallthru
          _
        %s465 = sand.u32 %s34, 1
        %s466 = scalar_lea.sflag [#allocation6], %s465
        %s467 = sand.u32 %s68, 1
        %s468 = smul.addr %s467, 2
        %s469 = scalar_lea.vmem [#allocation5], %s468
        // Predicated region
        $region73: #{tpu_custom_call.1} parent=67 // pred_check
          %p470 = pneg %p81
        $region74: #{tpu_custom_call.1} parent=67 // pred_check_branch
          %472 = sbr.rel (%p470) target = $region76
        $region75: #{tpu_custom_call.1} parent=67 // pred_region
          %473 = dma.done %s466, 32
        $region76: #{tpu_custom_call.1} parent=67 // pred_fallthru
          _
        // Predicated region
        $region77: #{tpu_custom_call.1} parent=67 // pred_check
          %p474 = pneg %p102
        $region78: #{tpu_custom_call.1} parent=67 // pred_check_branch
          %476 = sbr.rel (%p474) target = $region80
        $region79: #{tpu_custom_call.1} parent=67 // pred_region
          %477 = dma.done [#allocation6], 3072
        $region80: #{tpu_custom_call.1} parent=67 // pred_fallthru
          _
        // Predicated region
        $region81: #{tpu_custom_call.1} parent=67 // pred_check
          %p478 = pneg %p123
        $region82: #{tpu_custom_call.1} parent=67 // pred_check_branch
          %480 = sbr.rel (%p478) target = $region84
        $region83: #{tpu_custom_call.1} parent=67 // pred_region
          %481 = dma.done [#allocation9], 1024
        $region84: #{tpu_custom_call.1} parent=67 // pred_fallthru
          _
        // Predicated region
        $region85: #{tpu_custom_call.1} parent=67 // pred_check
          %p482 = pneg %p186
        $region86: #{tpu_custom_call.1} parent=67 // pred_check_branch
          %484 = sbr.rel (%p482) target = $region88
        $region87: #{tpu_custom_call.1} parent=67 // pred_region
          %485 = dma.done [#allocation9], 2048
        $region88: #{tpu_custom_call.1} parent=67 // pred_fallthru
          _
        // Predicated region
        $region89: #{tpu_custom_call.1} parent=67 // pred_check
          %p486 = pneg %p228
        $region90: #{tpu_custom_call.1} parent=67 // pred_check_branch
          %488 = sbr.rel (%p486) target = $region92
        $region91: #{tpu_custom_call.1} parent=67 // pred_region
          %489 = dma.done [#allocation12], 2048
        $region92: #{tpu_custom_call.1} parent=67 // pred_fallthru
          _
        %s490 = sand.u32 %s42, 1
        %s491 = scalar_lea.sflag [#allocation3], %s490
        %s492 = sand.u32 %s42, 1
        %s493 = smul.addr %s492, 32
        %s494 = scalar_lea.vmem [#allocation2], %s493
        %p495 = pneg %p55
        %p496 = pneg %p52
        %s497 = sand.u32 %s34, 1
        %s498 = scalar_lea.sflag [#allocation6], %s497
        %s499 = sand.u32 %s68, 1
        %s500 = smul.addr %s499, 2
        %s501 = scalar_lea.vmem [#allocation5], %s500
        %p502 = pneg %p81
        %p503 = pneg %p78
        %p504 = pneg %p102
        %p505 = pneg %p99
        %p506 = pneg %p123
        %p507 = pneg %p120
        %p508 = pneg %p144
        %p509 = pneg %p141
        %p510 = pneg %p165
        %p511 = pneg %p162
        %p512 = pneg %p186
        %p513 = pneg %p183
        %p514 = pneg %p207
        %p515 = pneg %p204
        %p516 = pneg %p228
        %p517 = pneg %p225
        %p518 = pneg %p249
        %p519 = pneg %p246
        %p520 = pneg %p270
        %p521 = pneg %p267
        %p522 = pneg %p291
        %p523 = pneg %p288
        %p524 = pneg %p317
        %p525 = pneg %p314
        %s526 = sand.u32 %s304, 1
        %s527 = scalar_lea.sflag [#allocation4], %s526
        %s528 = sand.u32 %s304, 1
        %s529 = smul.addr %s528, 2
        %s530 = scalar_lea.vmem [#allocation13], %s529
        %s531 = smul.u32 2, %s34
        %s532 = smul.u32 2, %s34
        %v534 = vld [vmem:[%s460] sm:$0xff]
        %v535 = vld [vmem:[%s460 + $0x8] sm:$0xff]
        %v536 = vld [vmem:[%s460 + $0x10] sm:$0xff]
        %v537 = vld [vmem:[%s460 + $0x18] sm:$0xff]
        %v538 = vpack.c.bf16 %v535, %v534
        %v539 = vpack.c.bf16 %v537, %v536
        %v540 = vld [vmem:[#allocation7] sm:$0xff]
        %v541 = vld [vmem:[#allocation7 + $0x8] sm:$0xf]
        %v542 = vld [vmem:[#allocation7 + $0xc] sm:$0xff]
        %v543 = vld [vmem:[#allocation7 + $0x14] sm:$0xf]
        %v544 = vld [vmem:[#allocation7 + $0x18] sm:$0xff]
        %v545 = vld [vmem:[#allocation7 + $0x20] sm:$0xf]
        %v546 = vld [vmem:[#allocation7 + $0x24] sm:$0xff]
        %v547 = vld [vmem:[#allocation7 + $0x2c] sm:$0xf]
        %v548 = vld [vmem:[#allocation7 + $0x30] sm:$0xff]
        %v549 = vld [vmem:[#allocation7 + $0x38] sm:$0xf]
        %v550 = vld [vmem:[#allocation7 + $0x3c] sm:$0xff]
        %v551 = vld [vmem:[#allocation7 + $0x44] sm:$0xf]
        %v552 = vld [vmem:[#allocation7 + $0x48] sm:$0xff]
        %v553 = vld [vmem:[#allocation7 + $0x50] sm:$0xf]
        %v554 = vld [vmem:[#allocation7 + $0x54] sm:$0xff]
        %v555 = vld [vmem:[#allocation7 + $0x5c] sm:$0xf]
        %v556 = vld [vmem:[#allocation7 + $0x60] sm:$0xff]
        %v557 = vld [vmem:[#allocation7 + $0x68] sm:$0xf]
        %v558 = vld [vmem:[#allocation7 + $0x6c] sm:$0xff]
        %v559 = vld [vmem:[#allocation7 + $0x74] sm:$0xf]
        %v560 = vld [vmem:[#allocation7 + $0x78] sm:$0xff]
        %v561 = vld [vmem:[#allocation7 + $0x80] sm:$0xf]
        %v562 = vld [vmem:[#allocation7 + $0x84] sm:$0xff]
        %v563 = vld [vmem:[#allocation7 + $0x8c] sm:$0xf]
        %v564 = vld [vmem:[#allocation7 + $0x90] sm:$0xff]
        %v565 = vld [vmem:[#allocation7 + $0x98] sm:$0xf]
        %v566 = vld [vmem:[#allocation7 + $0x9c] sm:$0xff]
        %v567 = vld [vmem:[#allocation7 + $0xa4] sm:$0xf]
        %v568 = vld [vmem:[#allocation7 + $0xa8] sm:$0xff]
        %v569 = vld [vmem:[#allocation7 + $0xb0] sm:$0xf]
        %v570 = vld [vmem:[#allocation7 + $0xb4] sm:$0xff]
        %v571 = vld [vmem:[#allocation7 + $0xbc] sm:$0xf]
        %v604 = vunpack.c.l.b16 %v540
        %v605 = vunpack.c.h.b16 %v540
        %v606 = vunpack.c.l.b16 %v541
        %v607 = vunpack.c.l.b16 %v542
        %v608 = vunpack.c.h.b16 %v542
        %v609 = vunpack.c.l.b16 %v543
        %v610 = vunpack.c.l.b16 %v544
        %v611 = vunpack.c.h.b16 %v544
        %v612 = vunpack.c.l.b16 %v545
        %v613 = vunpack.c.l.b16 %v546
        %v614 = vunpack.c.h.b16 %v546
        %v615 = vunpack.c.l.b16 %v547
        %v616 = vunpack.c.l.b16 %v548
        %v617 = vunpack.c.h.b16 %v548
        %v618 = vunpack.c.l.b16 %v549
        %v619 = vunpack.c.l.b16 %v550
        %v620 = vunpack.c.h.b16 %v550
        %v621 = vunpack.c.l.b16 %v551
        %v622 = vunpack.c.l.b16 %v552
        %v623 = vunpack.c.h.b16 %v552
        %v624 = vunpack.c.l.b16 %v553
        %v625 = vunpack.c.l.b16 %v554
        %v626 = vunpack.c.h.b16 %v554
        %v627 = vunpack.c.l.b16 %v555
        %v628 = vunpack.c.l.b16 %v556
        %v629 = vunpack.c.h.b16 %v556
        %v630 = vunpack.c.l.b16 %v557
        %v631 = vunpack.c.l.b16 %v558
        %v632 = vunpack.c.h.b16 %v558
        %v633 = vunpack.c.l.b16 %v559
        %v634 = vunpack.c.l.b16 %v560
        %v635 = vunpack.c.h.b16 %v560
        %v636 = vunpack.c.l.b16 %v561
        %v637 = vunpack.c.l.b16 %v562
        %v638 = vunpack.c.h.b16 %v562
        %v639 = vunpack.c.l.b16 %v563
        %v640 = vunpack.c.l.b16 %v564
        %v641 = vunpack.c.h.b16 %v564
        %v642 = vunpack.c.l.b16 %v565
        %v643 = vunpack.c.l.b16 %v566
        %v644 = vunpack.c.h.b16 %v566
        %v645 = vunpack.c.l.b16 %v567
        %v646 = vunpack.c.l.b16 %v568
        %v647 = vunpack.c.h.b16 %v568
        %v648 = vunpack.c.l.b16 %v569
        %v649 = vunpack.c.l.b16 %v570
        %v650 = vunpack.c.h.b16 %v570
        %v651 = vunpack.c.l.b16 %v571
        %v652 = vpack.c.b16 %v607, %v604
        %v653 = vpack.c.b16 %v608, %v605
        %v654 = vpack.c.b16 %v609, %v606
        %v655 = vpack.c.b16 %v613, %v610
        %v656 = vpack.c.b16 %v614, %v611
        %v657 = vpack.c.b16 %v615, %v612
        %v658 = vpack.c.b16 %v619, %v616
        %v659 = vpack.c.b16 %v620, %v617
        %v660 = vpack.c.b16 %v621, %v618
        %v661 = vpack.c.b16 %v625, %v622
        %v662 = vpack.c.b16 %v626, %v623
        %v663 = vpack.c.b16 %v627, %v624
        %v664 = vpack.c.b16 %v631, %v628
        %v665 = vpack.c.b16 %v632, %v629
        %v666 = vpack.c.b16 %v633, %v630
        %v667 = vpack.c.b16 %v637, %v634
        %v668 = vpack.c.b16 %v638, %v635
        %v669 = vpack.c.b16 %v639, %v636
        %v670 = vpack.c.b16 %v643, %v640
        %v671 = vpack.c.b16 %v644, %v641
        %v672 = vpack.c.b16 %v645, %v642
        %v673 = vpack.c.b16 %v649, %v646
        %v674 = vpack.c.b16 %v650, %v647
        %v675 = vpack.c.b16 %v651, %v648
        %700 = vmatprep.subr.bf16.mxu0 %v674
        %701 = vmatpush1.bf16.msra.mxu0 %v673
        %702 = vmatprep.subr.bf16.mxu0 %v671
        %703 = vmatpush1.bf16.msra.mxu0 %v670
        %704 = vmatprep.subr.bf16.mxu0 %v668
        %705 = vmatpush1.bf16.msra.mxu0 %v667
        %706 = vmatprep.subr.bf16.mxu0 %v665
        %707 = vmatpush1.bf16.msra.mxu0 %v664
        %708 = vmatprep.subr.bf16.mxu0 %v662
        %709 = vmatpush1.bf16.msra.mxu0 %v661
        %710 = vmatprep.subr.bf16.mxu0 %v659
        %711 = vmatpush1.bf16.msra.mxu0 %v658
        %712 = vmatprep.subr.bf16.mxu0 %v656
        %713 = vmatpush1.bf16.msra.mxu0 %v655
        %714 = vmatprep.subr.bf16.mxu0 %v653
        %715 = vmatpush1.bf16.msra.mxu0 %v652
        %716 = vmatprep.subr.bf16.mxu0 0
        %717 = vmatpush2.bf16.msra.mxu0 0
        %718 = vmatprep.subr.bf16.mxu0 0
        %719 = vmatpush2.bf16.msra.mxu0 0
        %720 = vmatprep.subr.bf16.mxu0 0
        %721 = vmatpush2.bf16.msra.mxu0 0
        %722 = vmatprep.subr.bf16.mxu0 0
        %723 = vmatpush2.bf16.msra.mxu0 0
        %724 = vmatprep.subr.bf16.mxu0 0
        %725 = vmatpush2.bf16.msra.mxu0 0
        %726 = vmatprep.subr.bf16.mxu0 0
        %727 = vmatpush2.bf16.msra.mxu0 0
        %728 = vmatprep.subr.bf16.mxu0 0
        %729 = vmatpush2.bf16.msra.mxu0 0
        %730 = vmatprep.subr.bf16.mxu0 0
        %731 = vmatpush2.bf16.msra.mxu0 0
        %732 = vmatprep.mubr.bf16.mxu0 0
        %733 = vmatmul.mubr.bf16.gmra.mxu0 %v538
        %v734 = vpop.f32.mrf.mxu0
        %v735 = vadd.f32 0.0, %v734
        %v736 = vpop.f32.mrf.mxu0
        %v737 = vadd.f32 0.0, %v736
        %v738 = vpop.f32.mrf.mxu0
        %v739 = vadd.f32 0.0, %v738
        %v740 = vpop.f32.mrf.mxu0
        %v741 = vadd.f32 0.0, %v740
        %742 = vmatprep.mubr.bf16.mxu0 0
        %743 = vmatmul.mubr.bf16.gmra.mxu0 %v539
        %v744 = vpop.f32.mrf.mxu0
        %v745 = vadd.f32 0.0, %v744
        %v746 = vpop.f32.mrf.mxu0
        %v747 = vadd.f32 0.0, %v746
        %v748 = vpop.f32.mrf.mxu0
        %v749 = vadd.f32 0.0, %v748
        %v750 = vpop.f32.mrf.mxu0
        %v751 = vadd.f32 0.0, %v750
        %752 = vdwg.mxu0
        %753 = vmatprep.subr.bf16.mxu0 0
        %754 = vmatpush1.bf16.msra.mxu0 %v675
        %755 = vmatprep.subr.bf16.mxu0 0
        %756 = vmatpush1.bf16.msra.mxu0 %v672
        %757 = vmatprep.subr.bf16.mxu0 0
        %758 = vmatpush1.bf16.msra.mxu0 %v669
        %759 = vmatprep.subr.bf16.mxu0 0
        %760 = vmatpush1.bf16.msra.mxu0 %v666
        %761 = vmatprep.subr.bf16.mxu0 0
        %762 = vmatpush1.bf16.msra.mxu0 %v663
        %763 = vmatprep.subr.bf16.mxu0 0
        %764 = vmatpush1.bf16.msra.mxu0 %v660
        %765 = vmatprep.subr.bf16.mxu0 0
        %766 = vmatpush1.bf16.msra.mxu0 %v657
        %767 = vmatprep.subr.bf16.mxu0 0
        %768 = vmatpush1.bf16.msra.mxu0 %v654
        %769 = vmatprep.subr.bf16.mxu0 0
        %770 = vmatpush2.bf16.msra.mxu0 0
        %771 = vmatprep.subr.bf16.mxu0 0
        %772 = vmatpush2.bf16.msra.mxu0 0
        %773 = vmatprep.subr.bf16.mxu0 0
        %774 = vmatpush2.bf16.msra.mxu0 0
        %775 = vmatprep.subr.bf16.mxu0 0
        %776 = vmatpush2.bf16.msra.mxu0 0
        %777 = vmatprep.subr.bf16.mxu0 0
        %778 = vmatpush2.bf16.msra.mxu0 0
        %779 = vmatprep.subr.bf16.mxu0 0
        %780 = vmatpush2.bf16.msra.mxu0 0
        %781 = vmatprep.subr.bf16.mxu0 0
        %782 = vmatpush2.bf16.msra.mxu0 0
        %783 = vmatprep.subr.bf16.mxu0 0
        %784 = vmatpush2.bf16.msra.mxu0 0
        %785 = vmatprep.mubr.bf16.mxu0 0
        %786 = vmatmul.mubr.bf16.gmra.mxu0 %v538
        %v787 = vpop.f32.mrf.mxu0
        %v788 = vadd.f32 0.0, %v787
        %v789 = vpop.f32.mrf.mxu0
        %v790 = vpop.f32.mrf.mxu0
        %v791 = vadd.f32 0.0, %v790
        %v792 = vpop.f32.mrf.mxu0
        %793 = vmatprep.mubr.bf16.mxu0 0
        %794 = vmatmul.mubr.bf16.gmra.mxu0 %v539
        %v795 = vpop.f32.mrf.mxu0
        %v796 = vadd.f32 0.0, %v795
        %v797 = vpop.f32.mrf.mxu0
        %v798 = vpop.f32.mrf.mxu0
        %v799 = vadd.f32 0.0, %v798
        %v800 = vpop.f32.mrf.mxu0
        %801 = vdwg.mxu0
        %v802 = vpack.c.bf16 %v739, %v735
        %v803 = vpack.c.bf16 %v749, %v745
        %v804 = vpack.c.bf16 %v741, %v737
        %v805 = vpack.c.bf16 %v751, %v747
        %806 = vmatprep.subr.bf16.mxu0 0
        %807 = vmatpush1.bf16.xpose.msra.mxu0 0
        %808 = vmatprep.subr.bf16.mxu0 0
        %809 = vmatpush1.bf16.xpose.msra.mxu0 0
        %810 = vmatprep.subr.bf16.mxu0 0
        %811 = vmatpush1.bf16.xpose.msra.mxu0 0
        %812 = vmatprep.subr.bf16.mxu0 0
        %813 = vmatpush1.bf16.xpose.msra.mxu0 0
        %814 = vmatprep.subr.bf16.mxu0 0
        %815 = vmatpush1.bf16.xpose.msra.mxu0 0
        %816 = vmatprep.subr.bf16.mxu0 0
        %817 = vmatpush1.bf16.xpose.msra.mxu0 0
        %818 = vmatprep.subr.bf16.mxu0 0
        %819 = vmatpush1.bf16.xpose.msra.mxu0 0
        %820 = vmatprep.subr.bf16.mxu0 0
        %821 = vmatpush1.bf16.xpose.msra.mxu0 %v804
        %822 = vmatprep.subr.bf16.mxu0 0
        %823 = vmatpush2.bf16.xpose.msra.mxu0 0
        %824 = vmatprep.subr.bf16.mxu0 0
        %825 = vmatpush2.bf16.xpose.msra.mxu0 0
        %826 = vmatprep.subr.bf16.mxu0 0
        %827 = vmatpush2.bf16.xpose.msra.mxu0 0
        %828 = vmatprep.subr.bf16.mxu0 0
        %829 = vmatpush2.bf16.xpose.msra.mxu0 0
        %830 = vmatprep.subr.bf16.mxu0 0
        %831 = vmatpush2.bf16.xpose.msra.mxu0 0
        %832 = vmatprep.subr.bf16.mxu0 0
        %833 = vmatpush2.bf16.xpose.msra.mxu0 0
        %834 = vmatprep.subr.bf16.mxu0 0
        %835 = vmatpush2.bf16.xpose.msra.mxu0 0
        %836 = vmatprep.subr.bf16.mxu0 0
        %837 = vmatpush2.bf16.xpose.msra.mxu0 0
        %838 = vmatprep.mubr.bf16.mxu0 0
        %839 = vmatmul.mubr.bf16.gmra.mxu0 %v802
        %v840 = vpop.f32.mrf.mxu0
        %v841 = vadd.f32 0.0, %v840
        %v842 = vpop.f32.mrf.mxu0
        %v843 = vpop.f32.mrf.mxu0
        %v844 = vadd.f32 0.0, %v843
        %v845 = vpop.f32.mrf.mxu0
        %846 = vdwg.mxu0
        %847 = vmatprep.subr.bf16.mxu0 0
        %848 = vmatpush1.bf16.xpose.msra.mxu0 0
        %849 = vmatprep.subr.bf16.mxu0 0
        %850 = vmatpush1.bf16.xpose.msra.mxu0 0
        %851 = vmatprep.subr.bf16.mxu0 0
        %852 = vmatpush1.bf16.xpose.msra.mxu0 0
        %853 = vmatprep.subr.bf16.mxu0 0
        %854 = vmatpush1.bf16.xpose.msra.mxu0 0
        %855 = vmatprep.subr.bf16.mxu0 0
        %856 = vmatpush1.bf16.xpose.msra.mxu0 0
        %857 = vmatprep.subr.bf16.mxu0 0
        %858 = vmatpush1.bf16.xpose.msra.mxu0 0
        %859 = vmatprep.subr.bf16.mxu0 0
        %860 = vmatpush1.bf16.xpose.msra.mxu0 0
        %861 = vmatprep.subr.bf16.mxu0 0
        %862 = vmatpush1.bf16.xpose.msra.mxu0 %v805
        %863 = vmatprep.subr.bf16.mxu0 0
        %864 = vmatpush2.bf16.xpose.msra.mxu0 0
        %865 = vmatprep.subr.bf16.mxu0 0
        %866 = vmatpush2.bf16.xpose.msra.mxu0 0
        %867 = vmatprep.subr.bf16.mxu0 0
        %868 = vmatpush2.bf16.xpose.msra.mxu0 0
        %869 = vmatprep.subr.bf16.mxu0 0
        %870 = vmatpush2.bf16.xpose.msra.mxu0 0
        %871 = vmatprep.subr.bf16.mxu0 0
        %872 = vmatpush2.bf16.xpose.msra.mxu0 0
        %873 = vmatprep.subr.bf16.mxu0 0
        %874 = vmatpush2.bf16.xpose.msra.mxu0 0
        %875 = vmatprep.subr.bf16.mxu0 0
        %876 = vmatpush2.bf16.xpose.msra.mxu0 0
        %877 = vmatprep.subr.bf16.mxu0 0
        %878 = vmatpush2.bf16.xpose.msra.mxu0 0
        %879 = vmatprep.mubr.bf16.mxu0 0
        %880 = vmatmul.mubr.bf16.gmra.mxu0 %v803
        %v881 = vpop.f32.mrf.mxu0
        %v882 = vadd.f32 0.0, %v881
        %v883 = vpop.f32.mrf.mxu0
        %v884 = vpop.f32.mrf.mxu0
        %v885 = vadd.f32 0.0, %v884
        %v886 = vpop.f32.mrf.mxu0
        %887 = vdwg.mxu0
        %v888 = vmul.f32 %v841, 0.088388346
        %v889 = vmul.f32 %v844, 0.088388346
        %v890 = vmul.f32 %v882, 0.088388346
        %v891 = vmul.f32 %v885, 0.088388346
        %v892 = vld [vmem:[%s469] sm:$0x1]
        %v893 = vld [vmem:[%s469 + $0x1] sm:$0x1]
        %v894 = vsub.f32 %v892, 1.0
        %v895 = vsub.f32 %v893, 1.0
        %v896 = vmul.f32 %v894, 1e+09
        %v897 = vmul.f32 %v895, 1e+09
        %v900 = vlaneseq
        %v901 = vshrl.u32 %v900, 7
        %v902 = vsub.s32 0, %v901
        %v903 = vrot.slane %v896, %v902
        %v904 = vlaneseq
        %v905 = vshrl.u32 %v904, 7
        %v906 = vsub.s32 0, %v905
        %v907 = vrot.slane %v897, %v906
        %v910 = vadd.f32 %v888, %v903
        %v911 = vadd.f32 %v889, %v903
        %v912 = vadd.f32 %v890, %v907
        %v913 = vadd.f32 %v891, %v907
        %vm914 = vcmask 130048
        %v915 = vsel %vm914, %v910, -inf
        %916 = vmax.xlane.f32.xlu0 %v915
        %v917 = vpop.xlane.xlu0 %916
        %v918 = vsel %vm914, %v911, -inf
        %919 = vmax.xlane.f32.xlu0 %v918
        %v920 = vpop.xlane.xlu0 %919
        %v921 = vsel %vm914, %v912, -inf
        %922 = vmax.xlane.f32.xlu0 %v921
        %v923 = vpop.xlane.xlu0 %922
        %v924 = vsel %vm914, %v913, -inf
        %925 = vmax.xlane.f32.xlu0 %v924
        %v926 = vpop.xlane.xlu0 %925
        %v927 = vsub.f32 %v910, %v917
        %v928 = vsub.f32 %v911, %v920
        %v929 = vsub.f32 %v912, %v923
        %v930 = vsub.f32 %v913, %v926
        %v931 = vmul.f32 %v927, 1.442695
        %v932 = vpow.pop %v931
        %v933 = vmul.f32 %v928, 1.442695
        %v934 = vpow.pop %v933
        %v935 = vmul.f32 %v929, 1.442695
        %v936 = vpow.pop %v935
        %v937 = vmul.f32 %v930, 1.442695
        %v938 = vpow.pop %v937
        %v939 = vsel %vm914, %v932, 0.0
        %940 = vadd.xlane.f32.xlu0 %v939
        %v941 = vpop.xlane.xlu0 %940
        %v942 = vsel %vm914, %v934, 0.0
        %943 = vadd.xlane.f32.xlu0 %v942
        %v944 = vpop.xlane.xlu0 %943
        %v945 = vsel %vm914, %v936, 0.0
        %946 = vadd.xlane.f32.xlu0 %v945
        %v947 = vpop.xlane.xlu0 %946
        %v948 = vsel %vm914, %v938, 0.0
        %949 = vadd.xlane.f32.xlu0 %v948
        %v950 = vpop.xlane.xlu0 %949
        %v951 = vrcp.pop %v941
        %v952 = vrcp.pop %v944
        %v953 = vrcp.pop %v947
        %v954 = vrcp.pop %v950
        %v955 = vmul.f32 %v932, %v951
        %v956 = vmul.f32 %v934, %v952
        %v957 = vmul.f32 %v936, %v953
        %v958 = vmul.f32 %v938, %v954
        %v959 = vpack.c.bf16 %v956, %v955
        %v960 = vpack.c.bf16 %v958, %v957
        %v961 = vpack.c.bf16 %v791, %v788
        %v962 = vpack.c.bf16 %v799, %v796
        %v964 = vsel %vm914, %v959, 0
        %966 = vmatprep.subr.bf16.mxu0 0
        %967 = vmatpush1.bf16.msra.mxu0 0
        %968 = vmatprep.subr.bf16.mxu0 0
        %969 = vmatpush1.bf16.msra.mxu0 0
        %970 = vmatprep.subr.bf16.mxu0 0
        %971 = vmatpush1.bf16.msra.mxu0 0
        %972 = vmatprep.subr.bf16.mxu0 0
        %973 = vmatpush1.bf16.msra.mxu0 0
        %974 = vmatprep.subr.bf16.mxu0 0
        %975 = vmatpush1.bf16.msra.mxu0 0
        %976 = vmatprep.subr.bf16.mxu0 0
        %977 = vmatpush1.bf16.msra.mxu0 0
        %978 = vmatprep.subr.bf16.mxu0 0
        %979 = vmatpush1.bf16.msra.mxu0 0
        %980 = vmatprep.subr.bf16.mxu0 0
        %981 = vmatpush1.bf16.msra.mxu0 %v961
        %982 = vmatprep.subr.bf16.mxu0 0
        %983 = vmatpush2.bf16.msra.mxu0 0
        %984 = vmatprep.subr.bf16.mxu0 0
        %985 = vmatpush2.bf16.msra.mxu0 0
        %986 = vmatprep.subr.bf16.mxu0 0
        %987 = vmatpush2.bf16.msra.mxu0 0
        %988 = vmatprep.subr.bf16.mxu0 0
        %989 = vmatpush2.bf16.msra.mxu0 0
        %990 = vmatprep.subr.bf16.mxu0 0
        %991 = vmatpush2.bf16.msra.mxu0 0
        %992 = vmatprep.subr.bf16.mxu0 0
        %993 = vmatpush2.bf16.msra.mxu0 0
        %994 = vmatprep.subr.bf16.mxu0 0
        %995 = vmatpush2.bf16.msra.mxu0 0
        %996 = vmatprep.subr.bf16.mxu0 0
        %997 = vmatpush2.bf16.msra.mxu0 0
        %998 = vmatprep.mubr.bf16.mxu0 0
        %999 = vmatmul.mubr.bf16.gmra.mxu0 %v964
        %v1000 = vpop.f32.mrf.mxu0
        %v1001 = vadd.f32 0.0, %v1000
        %v1002 = vpop.f32.mrf.mxu0
        %v1003 = vpop.f32.mrf.mxu0
        %v1004 = vadd.f32 0.0, %v1003
        %v1005 = vpop.f32.mrf.mxu0
        %1006 = vdwg.mxu0
        %v1008 = vsel %vm914, %v960, 0
        %1010 = vmatprep.subr.bf16.mxu0 0
        %1011 = vmatpush1.bf16.msra.mxu0 0
        %1012 = vmatprep.subr.bf16.mxu0 0
        %1013 = vmatpush1.bf16.msra.mxu0 0
        %1014 = vmatprep.subr.bf16.mxu0 0
        %1015 = vmatpush1.bf16.msra.mxu0 0
        %1016 = vmatprep.subr.bf16.mxu0 0
        %1017 = vmatpush1.bf16.msra.mxu0 0
        %1018 = vmatprep.subr.bf16.mxu0 0
        %1019 = vmatpush1.bf16.msra.mxu0 0
        %1020 = vmatprep.subr.bf16.mxu0 0
        %1021 = vmatpush1.bf16.msra.mxu0 0
        %1022 = vmatprep.subr.bf16.mxu0 0
        %1023 = vmatpush1.bf16.msra.mxu0 0
        %1024 = vmatprep.subr.bf16.mxu0 0
        %1025 = vmatpush1.bf16.msra.mxu0 %v962
        %1026 = vmatprep.subr.bf16.mxu0 0
        %1027 = vmatpush2.bf16.msra.mxu0 0
        %1028 = vmatprep.subr.bf16.mxu0 0
        %1029 = vmatpush2.bf16.msra.mxu0 0
        %1030 = vmatprep.subr.bf16.mxu0 0
        %1031 = vmatpush2.bf16.msra.mxu0 0
        %1032 = vmatprep.subr.bf16.mxu0 0
        %1033 = vmatpush2.bf16.msra.mxu0 0
        %1034 = vmatprep.subr.bf16.mxu0 0
        %1035 = vmatpush2.bf16.msra.mxu0 0
        %1036 = vmatprep.subr.bf16.mxu0 0
        %1037 = vmatpush2.bf16.msra.mxu0 0
        %1038 = vmatprep.subr.bf16.mxu0 0
        %1039 = vmatpush2.bf16.msra.mxu0 0
        %1040 = vmatprep.subr.bf16.mxu0 0
        %1041 = vmatpush2.bf16.msra.mxu0 0
        %1042 = vmatprep.mubr.bf16.mxu0 0
        %1043 = vmatmul.mubr.bf16.gmra.mxu0 %v1008
        %v1044 = vpop.f32.mrf.mxu0
        %v1045 = vadd.f32 0.0, %v1044
        %v1046 = vpop.f32.mrf.mxu0
        %v1047 = vpop.f32.mrf.mxu0
        %v1048 = vadd.f32 0.0, %v1047
        %v1049 = vpop.f32.mrf.mxu0
        %1050 = vdwg.mxu0
        %v1051 = vpack.c.bf16 %v1004, %v1001
        %v1052 = vpack.c.bf16 %v1048, %v1045
        %v1053 = vld [vmem:[#allocation8] sm:$0xf]
        %v1054 = vld [vmem:[#allocation8 + $0x4] sm:$0xf]
        %v1055 = vld [vmem:[#allocation8 + $0x8] sm:$0xf]
        %v1056 = vld [vmem:[#allocation8 + $0xc] sm:$0xf]
        %v1057 = vld [vmem:[#allocation8 + $0x10] sm:$0xf]
        %v1058 = vld [vmem:[#allocation8 + $0x14] sm:$0xf]
        %v1059 = vld [vmem:[#allocation8 + $0x18] sm:$0xf]
        %v1060 = vld [vmem:[#allocation8 + $0x1c] sm:$0xf]
        %v1061 = vld [vmem:[#allocation8 + $0x20] sm:$0xf]
        %v1062 = vld [vmem:[#allocation8 + $0x24] sm:$0xf]
        %v1063 = vld [vmem:[#allocation8 + $0x28] sm:$0xf]
        %v1064 = vld [vmem:[#allocation8 + $0x2c] sm:$0xf]
        %v1065 = vld [vmem:[#allocation8 + $0x30] sm:$0xf]
        %v1066 = vld [vmem:[#allocation8 + $0x34] sm:$0xf]
        %v1067 = vld [vmem:[#allocation8 + $0x38] sm:$0xf]
        %v1068 = vld [vmem:[#allocation8 + $0x3c] sm:$0xf]
        %v1085 = vunpack.c.l.b16 %v1053
        %v1086 = vunpack.c.l.b16 %v1054
        %v1087 = vunpack.c.l.b16 %v1055
        %v1088 = vunpack.c.l.b16 %v1056
        %v1089 = vunpack.c.l.b16 %v1057
        %v1090 = vunpack.c.l.b16 %v1058
        %v1091 = vunpack.c.l.b16 %v1059
        %v1092 = vunpack.c.l.b16 %v1060
        %v1093 = vunpack.c.l.b16 %v1061
        %v1094 = vunpack.c.l.b16 %v1062
        %v1095 = vunpack.c.l.b16 %v1063
        %v1096 = vunpack.c.l.b16 %v1064
        %v1097 = vunpack.c.l.b16 %v1065
        %v1098 = vunpack.c.l.b16 %v1066
        %v1099 = vunpack.c.l.b16 %v1067
        %v1100 = vunpack.c.l.b16 %v1068
        %v1101 = vpack.c.b16 %v1086, %v1085
        %v1102 = vpack.c.b16 %v1088, %v1087
        %v1103 = vpack.c.b16 %v1090, %v1089
        %v1104 = vpack.c.b16 %v1092, %v1091
        %v1105 = vpack.c.b16 %v1094, %v1093
        %v1106 = vpack.c.b16 %v1096, %v1095
        %v1107 = vpack.c.b16 %v1098, %v1097
        %v1108 = vpack.c.b16 %v1100, %v1099
        %1117 = vmatprep.subr.bf16.mxu0 0
        %1118 = vmatpush1.bf16.msra.mxu0 %v1108
        %1119 = vmatprep.subr.bf16.mxu0 0
        %1120 = vmatpush1.bf16.msra.mxu0 %v1107
        %1121 = vmatprep.subr.bf16.mxu0 0
        %1122 = vmatpush1.bf16.msra.mxu0 %v1106
        %1123 = vmatprep.subr.bf16.mxu0 0
        %1124 = vmatpush1.bf16.msra.mxu0 %v1105
        %1125 = vmatprep.subr.bf16.mxu0 0
        %1126 = vmatpush1.bf16.msra.mxu0 %v1104
        %1127 = vmatprep.subr.bf16.mxu0 0
        %1128 = vmatpush1.bf16.msra.mxu0 %v1103
        %1129 = vmatprep.subr.bf16.mxu0 0
        %1130 = vmatpush1.bf16.msra.mxu0 %v1102
        %1131 = vmatprep.subr.bf16.mxu0 0
        %1132 = vmatpush1.bf16.msra.mxu0 %v1101
        %1133 = vmatprep.subr.bf16.mxu0 0
        %1134 = vmatpush2.bf16.msra.mxu0 0
        %1135 = vmatprep.subr.bf16.mxu0 0
        %1136 = vmatpush2.bf16.msra.mxu0 0
        %1137 = vmatprep.subr.bf16.mxu0 0
        %1138 = vmatpush2.bf16.msra.mxu0 0
        %1139 = vmatprep.subr.bf16.mxu0 0
        %1140 = vmatpush2.bf16.msra.mxu0 0
        %1141 = vmatprep.subr.bf16.mxu0 0
        %1142 = vmatpush2.bf16.msra.mxu0 0
        %1143 = vmatprep.subr.bf16.mxu0 0
        %1144 = vmatpush2.bf16.msra.mxu0 0
        %1145 = vmatprep.subr.bf16.mxu0 0
        %1146 = vmatpush2.bf16.msra.mxu0 0
        %1147 = vmatprep.subr.bf16.mxu0 0
        %1148 = vmatpush2.bf16.msra.mxu0 0
        %1149 = vmatprep.mubr.bf16.mxu0 0
        %1150 = vmatmul.mubr.bf16.gmra.mxu0 %v1051
        %v1151 = vpop.f32.mrf.mxu0
        %v1152 = vadd.f32 0.0, %v1151
        %v1153 = vpop.f32.mrf.mxu0
        %v1154 = vpop.f32.mrf.mxu0
        %v1155 = vadd.f32 0.0, %v1154
        %v1156 = vpop.f32.mrf.mxu0
        %1157 = vmatprep.mubr.bf16.mxu0 0
        %1158 = vmatmul.mubr.bf16.gmra.mxu0 %v1052
        %v1159 = vpop.f32.mrf.mxu0
        %v1160 = vadd.f32 0.0, %v1159
        %v1161 = vpop.f32.mrf.mxu0
        %v1162 = vpop.f32.mrf.mxu0
        %v1163 = vadd.f32 0.0, %v1162
        %v1164 = vpop.f32.mrf.mxu0
        %1165 = vdwg.mxu0
        %v1166 = vadd.f32 %v534, %v1152
        %v1167 = vadd.f32 %v535, %v1155
        %v1168 = vadd.f32 %v536, %v1160
        %v1169 = vadd.f32 %v537, %v1163
        %1170 = vadd.xlane.f32.xlu0 %v1166
        %v1171 = vpop.xlane.xlu0 %1170
        %1172 = vadd.xlane.f32.xlu0 %v1167
        %v1173 = vpop.xlane.xlu0 %1172
        %1174 = vadd.xlane.f32.xlu0 %v1168
        %v1175 = vpop.xlane.xlu0 %1174
        %1176 = vadd.xlane.f32.xlu0 %v1169
        %v1177 = vpop.xlane.xlu0 %1176
        %v1178 = vrcp.pop 128.0
        %v1179 = vmul.f32 %v1171, %v1178
        %v1180 = vmul.f32 %v1173, %v1178
        %v1181 = vmul.f32 %v1175, %v1178
        %v1182 = vmul.f32 %v1177, %v1178
        %v1183 = vsub.f32 %v1166, %v1179
        %v1184 = vsub.f32 %v1167, %v1180
        %v1185 = vsub.f32 %v1168, %v1181
        %v1186 = vsub.f32 %v1169, %v1182
        %v1187 = vmul.f32 %v1183, %v1183
        %v1188 = vmul.f32 %v1184, %v1184
        %v1189 = vmul.f32 %v1185, %v1185
        %v1190 = vmul.f32 %v1186, %v1186
        %1191 = vadd.xlane.f32.xlu0 %v1187
        %v1192 = vpop.xlane.xlu0 %1191
        %1193 = vadd.xlane.f32.xlu0 %v1188
        %v1194 = vpop.xlane.xlu0 %1193
        %1195 = vadd.xlane.f32.xlu0 %v1189
        %v1196 = vpop.xlane.xlu0 %1195
        %1197 = vadd.xlane.f32.xlu0 %v1190
        %v1198 = vpop.xlane.xlu0 %1197
        %v1199 = vmul.f32 %v1192, %v1178
        %v1200 = vmul.f32 %v1194, %v1178
        %v1201 = vmul.f32 %v1196, %v1178
        %v1202 = vmul.f32 %v1198, %v1178
        %v1203 = vadd.f32 %v1199, 1e-05
        %v1204 = vadd.f32 %v1200, 1e-05
        %v1205 = vadd.f32 %v1201, 1e-05
        %v1206 = vadd.f32 %v1202, 1e-05
        %v1207 = vrsqrt.pop %v1203
        %v1208 = vrsqrt.pop %v1204
        %v1209 = vrsqrt.pop %v1205
        %v1210 = vrsqrt.pop %v1206
        %v1211 = vmul.f32 %v1183, %v1207
        %v1212 = vmul.f32 %v1184, %v1208
        %v1213 = vmul.f32 %v1185, %v1209
        %v1214 = vmul.f32 %v1186, %v1210
        %v1215 = vld [vmem:[%s4] sm:$0x1]
        %v1217 = vlaneseq
        %v1218 = vshrl.u32 %v1217, 7
        %v1219 = vsub.s32 0, %v1218
        %v1220 = vrot.slane %v1215, %v1219
        %v1222 = vmul.f32 %v1211, %v1220
        %v1223 = vmul.f32 %v1212, %v1220
        %v1224 = vmul.f32 %v1213, %v1220
        %v1225 = vmul.f32 %v1214, %v1220
        %v1226 = vld [vmem:[%s5] sm:$0x1]
        %v1228 = vlaneseq
        %v1229 = vshrl.u32 %v1228, 7
        %v1230 = vsub.s32 0, %v1229
        %v1231 = vrot.slane %v1226, %v1230
        %v1233 = vadd.f32 %v1222, %v1231
        %v1234 = vadd.f32 %v1223, %v1231
        %v1235 = vadd.f32 %v1224, %v1231
        %v1236 = vadd.f32 %v1225, %v1231
        %v1237 = vpack.c.bf16 %v1234, %v1233
        %v1238 = vpack.c.bf16 %v1236, %v1235
        %v1239 = vld [vmem:[#allocation10] sm:$0xff]
        %v1240 = vld [vmem:[#allocation10 + $0x8] sm:$0xff]
        %v1241 = vld [vmem:[#allocation10 + $0x10] sm:$0xff]
        %v1242 = vld [vmem:[#allocation10 + $0x18] sm:$0xff]
        %v1243 = vld [vmem:[#allocation10 + $0x20] sm:$0xff]
        %v1244 = vld [vmem:[#allocation10 + $0x28] sm:$0xff]
        %v1245 = vld [vmem:[#allocation10 + $0x30] sm:$0xff]
        %v1246 = vld [vmem:[#allocation10 + $0x38] sm:$0xff]
        %v1247 = vld [vmem:[#allocation10 + $0x40] sm:$0xff]
        %v1248 = vld [vmem:[#allocation10 + $0x48] sm:$0xff]
        %v1249 = vld [vmem:[#allocation10 + $0x50] sm:$0xff]
        %v1250 = vld [vmem:[#allocation10 + $0x58] sm:$0xff]
        %v1251 = vld [vmem:[#allocation10 + $0x60] sm:$0xff]
        %v1252 = vld [vmem:[#allocation10 + $0x68] sm:$0xff]
        %v1253 = vld [vmem:[#allocation10 + $0x70] sm:$0xff]
        %v1254 = vld [vmem:[#allocation10 + $0x78] sm:$0xff]
        %v1255 = vld [vmem:[%s7] sm:$0x3]
        %v1257 = vlaneseq
        %v1258 = vshrl.u32 %v1257, 7
        %v1259 = vsub.s32 0, %v1258
        %v1260 = vrot.slane %v1255, %v1259
        %v1261 = vlaneseq
        %v1262 = vshrl.u32 %v1261, 7
        %v1263 = vsub.s32 1, %v1262
        %v1264 = vrot.slane %v1255, %v1263
        %v1283 = vunpack.c.l.b16 %v1239
        %v1284 = vunpack.c.h.b16 %v1239
        %v1285 = vunpack.c.l.b16 %v1240
        %v1286 = vunpack.c.h.b16 %v1240
        %v1287 = vunpack.c.l.b16 %v1241
        %v1288 = vunpack.c.h.b16 %v1241
        %v1289 = vunpack.c.l.b16 %v1242
        %v1290 = vunpack.c.h.b16 %v1242
        %v1291 = vunpack.c.l.b16 %v1243
        %v1292 = vunpack.c.h.b16 %v1243
        %v1293 = vunpack.c.l.b16 %v1244
        %v1294 = vunpack.c.h.b16 %v1244
        %v1295 = vunpack.c.l.b16 %v1245
        %v1296 = vunpack.c.h.b16 %v1245
        %v1297 = vunpack.c.l.b16 %v1246
        %v1298 = vunpack.c.h.b16 %v1246
        %v1299 = vunpack.c.l.b16 %v1247
        %v1300 = vunpack.c.h.b16 %v1247
        %v1301 = vunpack.c.l.b16 %v1248
        %v1302 = vunpack.c.h.b16 %v1248
        %v1303 = vunpack.c.l.b16 %v1249
        %v1304 = vunpack.c.h.b16 %v1249
        %v1305 = vunpack.c.l.b16 %v1250
        %v1306 = vunpack.c.h.b16 %v1250
        %v1307 = vunpack.c.l.b16 %v1251
        %v1308 = vunpack.c.h.b16 %v1251
        %v1309 = vunpack.c.l.b16 %v1252
        %v1310 = vunpack.c.h.b16 %v1252
        %v1311 = vunpack.c.l.b16 %v1253
        %v1312 = vunpack.c.h.b16 %v1253
        %v1313 = vunpack.c.l.b16 %v1254
        %v1314 = vunpack.c.h.b16 %v1254
        %v1315 = vpack.c.b16 %v1285, %v1283
        %v1316 = vpack.c.b16 %v1286, %v1284
        %v1317 = vpack.c.b16 %v1289, %v1287
        %v1318 = vpack.c.b16 %v1290, %v1288
        %v1319 = vpack.c.b16 %v1293, %v1291
        %v1320 = vpack.c.b16 %v1294, %v1292
        %v1321 = vpack.c.b16 %v1297, %v1295
        %v1322 = vpack.c.b16 %v1298, %v1296
        %v1323 = vpack.c.b16 %v1301, %v1299
        %v1324 = vpack.c.b16 %v1302, %v1300
        %v1325 = vpack.c.b16 %v1305, %v1303
        %v1326 = vpack.c.b16 %v1306, %v1304
        %v1327 = vpack.c.b16 %v1309, %v1307
        %v1328 = vpack.c.b16 %v1310, %v1308
        %v1329 = vpack.c.b16 %v1313, %v1311
        %v1330 = vpack.c.b16 %v1314, %v1312
        %1347 = vmatprep.subr.bf16.mxu0 %v1330
        %1348 = vmatpush1.bf16.msra.mxu0 %v1329
        %1349 = vmatprep.subr.bf16.mxu0 %v1328
        %1350 = vmatpush1.bf16.msra.mxu0 %v1327
        %1351 = vmatprep.subr.bf16.mxu0 %v1326
        %1352 = vmatpush1.bf16.msra.mxu0 %v1325
        %1353 = vmatprep.subr.bf16.mxu0 %v1324
        %1354 = vmatpush1.bf16.msra.mxu0 %v1323
        %1355 = vmatprep.subr.bf16.mxu0 %v1322
        %1356 = vmatpush1.bf16.msra.mxu0 %v1321
        %1357 = vmatprep.subr.bf16.mxu0 %v1320
        %1358 = vmatpush1.bf16.msra.mxu0 %v1319
        %1359 = vmatprep.subr.bf16.mxu0 %v1318
        %1360 = vmatpush1.bf16.msra.mxu0 %v1317
        %1361 = vmatprep.subr.bf16.mxu0 %v1316
        %1362 = vmatpush1.bf16.msra.mxu0 %v1315
        %1363 = vmatprep.subr.bf16.mxu0 0
        %1364 = vmatpush2.bf16.msra.mxu0 0
        %1365 = vmatprep.subr.bf16.mxu0 0
        %1366 = vmatpush2.bf16.msra.mxu0 0
        %1367 = vmatprep.subr.bf16.mxu0 0
        %1368 = vmatpush2.bf16.msra.mxu0 0
        %1369 = vmatprep.subr.bf16.mxu0 0
        %1370 = vmatpush2.bf16.msra.mxu0 0
        %1371 = vmatprep.subr.bf16.mxu0 0
        %1372 = vmatpush2.bf16.msra.mxu0 0
        %1373 = vmatprep.subr.bf16.mxu0 0
        %1374 = vmatpush2.bf16.msra.mxu0 0
        %1375 = vmatprep.subr.bf16.mxu0 0
        %1376 = vmatpush2.bf16.msra.mxu0 0
        %1377 = vmatprep.subr.bf16.mxu0 0
        %1378 = vmatpush2.bf16.msra.mxu0 0
        %1379 = vmatprep.mubr.bf16.mxu0 0
        %1380 = vmatmul.mubr.bf16.gmra.mxu0 %v1237
        %v1381 = vpop.f32.mrf.mxu0
        %v1382 = vadd.f32 %v1260, %v1381
        %v1383 = vpop.f32.mrf.mxu0
        %v1384 = vadd.f32 %v1264, %v1383
        %v1385 = vpop.f32.mrf.mxu0
        %v1386 = vadd.f32 %v1260, %v1385
        %v1387 = vpop.f32.mrf.mxu0
        %v1388 = vadd.f32 %v1264, %v1387
        %1389 = vmatprep.mubr.bf16.mxu0 0
        %1390 = vmatmul.mubr.bf16.gmra.mxu0 %v1238
        %v1391 = vpop.f32.mrf.mxu0
        %v1392 = vadd.f32 %v1260, %v1391
        %v1393 = vpop.f32.mrf.mxu0
        %v1394 = vadd.f32 %v1264, %v1393
        %v1395 = vpop.f32.mrf.mxu0
        %v1396 = vadd.f32 %v1260, %v1395
        %v1397 = vpop.f32.mrf.mxu0
        %v1398 = vadd.f32 %v1264, %v1397
        %1399 = vdwg.mxu0
        %v1400 = vmax.f32 %v1382, 0.0
        %v1401 = vmax.f32 %v1384, 0.0
        %v1402 = vmax.f32 %v1386, 0.0
        %v1403 = vmax.f32 %v1388, 0.0
        %v1404 = vmax.f32 %v1392, 0.0
        %v1405 = vmax.f32 %v1394, 0.0
        %v1406 = vmax.f32 %v1396, 0.0
        %v1407 = vmax.f32 %v1398, 0.0
        %v1408 = vpack.c.bf16 %v1402, %v1400
        %v1409 = vpack.c.bf16 %v1403, %v1401
        %v1410 = vpack.c.bf16 %v1406, %v1404
        %v1411 = vpack.c.bf16 %v1407, %v1405
        %v1412 = vld [vmem:[#allocation11] sm:$0xf]
        %v1413 = vld [vmem:[#allocation11 + $0x4] sm:$0xf]
        %v1414 = vld [vmem:[#allocation11 + $0x8] sm:$0xf]
        %v1415 = vld [vmem:[#allocation11 + $0xc] sm:$0xf]
        %v1416 = vld [vmem:[#allocation11 + $0x10] sm:$0xf]
        %v1417 = vld [vmem:[#allocation11 + $0x14] sm:$0xf]
        %v1418 = vld [vmem:[#allocation11 + $0x18] sm:$0xf]
        %v1419 = vld [vmem:[#allocation11 + $0x1c] sm:$0xf]
        %v1420 = vld [vmem:[#allocation11 + $0x20] sm:$0xf]
        %v1421 = vld [vmem:[#allocation11 + $0x24] sm:$0xf]
        %v1422 = vld [vmem:[#allocation11 + $0x28] sm:$0xf]
        %v1423 = vld [vmem:[#allocation11 + $0x2c] sm:$0xf]
        %v1424 = vld [vmem:[#allocation11 + $0x30] sm:$0xf]
        %v1425 = vld [vmem:[#allocation11 + $0x34] sm:$0xf]
        %v1426 = vld [vmem:[#allocation11 + $0x38] sm:$0xf]
        %v1427 = vld [vmem:[#allocation11 + $0x3c] sm:$0xf]
        %v1428 = vld [vmem:[#allocation11 + $0x40] sm:$0xf]
        %v1429 = vld [vmem:[#allocation11 + $0x44] sm:$0xf]
        %v1430 = vld [vmem:[#allocation11 + $0x48] sm:$0xf]
        %v1431 = vld [vmem:[#allocation11 + $0x4c] sm:$0xf]
        %v1432 = vld [vmem:[#allocation11 + $0x50] sm:$0xf]
        %v1433 = vld [vmem:[#allocation11 + $0x54] sm:$0xf]
        %v1434 = vld [vmem:[#allocation11 + $0x58] sm:$0xf]
        %v1435 = vld [vmem:[#allocation11 + $0x5c] sm:$0xf]
        %v1436 = vld [vmem:[#allocation11 + $0x60] sm:$0xf]
        %v1437 = vld [vmem:[#allocation11 + $0x64] sm:$0xf]
        %v1438 = vld [vmem:[#allocation11 + $0x68] sm:$0xf]
        %v1439 = vld [vmem:[#allocation11 + $0x6c] sm:$0xf]
        %v1440 = vld [vmem:[#allocation11 + $0x70] sm:$0xf]
        %v1441 = vld [vmem:[#allocation11 + $0x74] sm:$0xf]
        %v1442 = vld [vmem:[#allocation11 + $0x78] sm:$0xf]
        %v1443 = vld [vmem:[#allocation11 + $0x7c] sm:$0xf]
        %v1444 = vld [vmem:[%s9] sm:$0x1]
        %v1446 = vlaneseq
        %v1447 = vshrl.u32 %v1446, 7
        %v1448 = vsub.s32 0, %v1447
        %v1449 = vrot.slane %v1444, %v1448
        %v1483 = vunpack.c.l.b16 %v1412
        %v1484 = vunpack.c.l.b16 %v1413
        %v1485 = vunpack.c.l.b16 %v1414
        %v1486 = vunpack.c.l.b16 %v1415
        %v1487 = vunpack.c.l.b16 %v1416
        %v1488 = vunpack.c.l.b16 %v1417
        %v1489 = vunpack.c.l.b16 %v1418
        %v1490 = vunpack.c.l.b16 %v1419
        %v1491 = vunpack.c.l.b16 %v1420
        %v1492 = vunpack.c.l.b16 %v1421
        %v1493 = vunpack.c.l.b16 %v1422
        %v1494 = vunpack.c.l.b16 %v1423
        %v1495 = vunpack.c.l.b16 %v1424
        %v1496 = vunpack.c.l.b16 %v1425
        %v1497 = vunpack.c.l.b16 %v1426
        %v1498 = vunpack.c.l.b16 %v1427
        %v1499 = vunpack.c.l.b16 %v1428
        %v1500 = vunpack.c.l.b16 %v1429
        %v1501 = vunpack.c.l.b16 %v1430
        %v1502 = vunpack.c.l.b16 %v1431
        %v1503 = vunpack.c.l.b16 %v1432
        %v1504 = vunpack.c.l.b16 %v1433
        %v1505 = vunpack.c.l.b16 %v1434
        %v1506 = vunpack.c.l.b16 %v1435
        %v1507 = vunpack.c.l.b16 %v1436
        %v1508 = vunpack.c.l.b16 %v1437
        %v1509 = vunpack.c.l.b16 %v1438
        %v1510 = vunpack.c.l.b16 %v1439
        %v1511 = vunpack.c.l.b16 %v1440
        %v1512 = vunpack.c.l.b16 %v1441
        %v1513 = vunpack.c.l.b16 %v1442
        %v1514 = vunpack.c.l.b16 %v1443
        %v1515 = vpack.c.b16 %v1484, %v1483
        %v1516 = vpack.c.b16 %v1486, %v1485
        %v1517 = vpack.c.b16 %v1488, %v1487
        %v1518 = vpack.c.b16 %v1490, %v1489
        %v1519 = vpack.c.b16 %v1492, %v1491
        %v1520 = vpack.c.b16 %v1494, %v1493
        %v1521 = vpack.c.b16 %v1496, %v1495
        %v1522 = vpack.c.b16 %v1498, %v1497
        %v1523 = vpack.c.b16 %v1500, %v1499
        %v1524 = vpack.c.b16 %v1502, %v1501
        %v1525 = vpack.c.b16 %v1504, %v1503
        %v1526 = vpack.c.b16 %v1506, %v1505
        %v1527 = vpack.c.b16 %v1508, %v1507
        %v1528 = vpack.c.b16 %v1510, %v1509
        %v1529 = vpack.c.b16 %v1512, %v1511
        %v1530 = vpack.c.b16 %v1514, %v1513
        %1547 = vmatprep.subr.bf16.mxu0 0
        %1548 = vmatpush1.bf16.msra.mxu0 %v1522
        %1549 = vmatprep.subr.bf16.mxu0 0
        %1550 = vmatpush1.bf16.msra.mxu0 %v1521
        %1551 = vmatprep.subr.bf16.mxu0 0
        %1552 = vmatpush1.bf16.msra.mxu0 %v1520
        %1553 = vmatprep.subr.bf16.mxu0 0
        %1554 = vmatpush1.bf16.msra.mxu0 %v1519
        %1555 = vmatprep.subr.bf16.mxu0 0
        %1556 = vmatpush1.bf16.msra.mxu0 %v1518
        %1557 = vmatprep.subr.bf16.mxu0 0
        %1558 = vmatpush1.bf16.msra.mxu0 %v1517
        %1559 = vmatprep.subr.bf16.mxu0 0
        %1560 = vmatpush1.bf16.msra.mxu0 %v1516
        %1561 = vmatprep.subr.bf16.mxu0 0
        %1562 = vmatpush1.bf16.msra.mxu0 %v1515
        %1563 = vmatprep.subr.bf16.mxu0 0
        %1564 = vmatpush2.bf16.msra.mxu0 %v1530
        %1565 = vmatprep.subr.bf16.mxu0 0
        %1566 = vmatpush2.bf16.msra.mxu0 %v1529
        %1567 = vmatprep.subr.bf16.mxu0 0
        %1568 = vmatpush2.bf16.msra.mxu0 %v1528
        %1569 = vmatprep.subr.bf16.mxu0 0
        %1570 = vmatpush2.bf16.msra.mxu0 %v1527
        %1571 = vmatprep.subr.bf16.mxu0 0
        %1572 = vmatpush2.bf16.msra.mxu0 %v1526
        %1573 = vmatprep.subr.bf16.mxu0 0
        %1574 = vmatpush2.bf16.msra.mxu0 %v1525
        %1575 = vmatprep.subr.bf16.mxu0 0
        %1576 = vmatpush2.bf16.msra.mxu0 %v1524
        %1577 = vmatprep.subr.bf16.mxu0 0
        %1578 = vmatpush2.bf16.msra.mxu0 %v1523
        %1579 = vmatprep.mubr.bf16.mxu0 %v1409
        %1580 = vmatmul.mubr.bf16.gmra.mxu0 %v1408
        %v1581 = vpop.f32.mrf.mxu0
        %v1582 = vadd.f32 %v1449, %v1581
        %v1583 = vpop.f32.mrf.mxu0
        %v1584 = vpop.f32.mrf.mxu0
        %v1585 = vpop.f32.mrf.mxu0
        %1586 = vmatprep.mubr.bf16.mxu0 %v1411
        %1587 = vmatmul.mubr.bf16.gmra.mxu0 %v1410
        %v1588 = vpop.f32.mrf.mxu0
        %v1589 = vadd.f32 %v1449, %v1588
        %v1590 = vpop.f32.mrf.mxu0
        %v1591 = vpop.f32.mrf.mxu0
        %v1592 = vpop.f32.mrf.mxu0
        %1593 = vdwg.mxu0
        %v1594 = vadd.f32 %v1233, %v1582
        %v1595 = vadd.f32 %v1235, %v1589
        %1596 = vadd.xlane.f32.xlu0 %v1594
        %v1597 = vpop.xlane.xlu0 %1596
        %1598 = vadd.xlane.f32.xlu0 %v1595
        %v1599 = vpop.xlane.xlu0 %1598
        %v1600 = vmul.f32 %v1597, %v1178
        %v1601 = vmul.f32 %v1599, %v1178
        %v1602 = vsub.f32 %v1594, %v1600
        %v1603 = vsub.f32 %v1595, %v1601
        %v1604 = vmul.f32 %v1602, %v1602
        %v1605 = vmul.f32 %v1603, %v1603
        %1606 = vadd.xlane.f32.xlu0 %v1604
        %v1607 = vpop.xlane.xlu0 %1606
        %1608 = vadd.xlane.f32.xlu0 %v1605
        %v1609 = vpop.xlane.xlu0 %1608
        %v1610 = vmul.f32 %v1607, %v1178
        %v1611 = vmul.f32 %v1609, %v1178
        %v1612 = vadd.f32 %v1610, 1e-05
        %v1613 = vadd.f32 %v1611, 1e-05
        %v1614 = vrsqrt.pop %v1612
        %v1615 = vrsqrt.pop %v1613
        %v1616 = vmul.f32 %v1602, %v1614
        %v1617 = vmul.f32 %v1603, %v1615
        %v1618 = vld [vmem:[%s10] sm:$0x1]
        %v1620 = vlaneseq
        %v1621 = vshrl.u32 %v1620, 7
        %v1622 = vsub.s32 0, %v1621
        %v1623 = vrot.slane %v1618, %v1622
        %v1625 = vmul.f32 %v1616, %v1623
        %v1626 = vmul.f32 %v1617, %v1623
        %v1627 = vld [vmem:[%s11] sm:$0x1]
        %v1629 = vlaneseq
        %v1630 = vshrl.u32 %v1629, 7
        %v1631 = vsub.s32 0, %v1630
        %v1632 = vrot.slane %v1627, %v1631
        %v1634 = vadd.f32 %v1625, %v1632
        %v1635 = vadd.f32 %v1626, %v1632
        %v1638 = vrot.slane %v1635, 7
        %vm1639 = vcmask 1041409
        %v1640 = vsel %vm1639, %v1638, %v1634
        %1642 = vst [vmem:[%s530] sm:$0x3] %v1640
        %s1643 = sand.u32 %s304, 1
        %s1644 = scalar_lea.sflag [#allocation4], %s1643
        %s1645 = sand.u32 %s304, 1
        %s1646 = smul.addr %s1645, 2
        %s1647 = scalar_lea.vmem [#allocation13], %s1646
        // Predicated region
        $region93: #{tpu_custom_call.1} parent=67 // pred_check
          %p1648 = pneg %p314
        $region94: #{tpu_custom_call.1} parent=67 // pred_check_branch
          %1650 = sbr.rel (%p1648) target = $region96
        $region95: #{tpu_custom_call.1} parent=67 // pred_region
          %s1652 = ssub.s32 32, 32
          %1653 = vsyncadd %s1644, %s1652
          %s1654 = smul.addr %s34, 32
          %s1655 = scalar_lea.hbm %s12, %s1654
          %s1657 = sshll.u32 %s1647, 4
          %s1658 = int_to_ptr.vmem [resolvable:$true] %s1657
          %1660 = dma.vmem_to_hbm [thread:$0]  %s1658, 32, %s1655, %s1644
        $region96: #{tpu_custom_call.1} parent=67 // pred_fallthru
          _
      $region68: #{tpu_custom_call.1} parent=5 // pred_fallthru
        _
      %p1661 = scmp.le.s32.totalorder 2, %s29
      // Predicated region
      $region97: #{tpu_custom_call.1} parent=5 // pred_check
        %p1662 = pneg %p1661
      $region98: #{tpu_custom_call.1} parent=5 // pred_check_branch
        %1664 = sbr.rel (%p1662) target = $region100
      $region99: #{tpu_custom_call.1} parent=5 // pred_region
        %s1665 = ssub.s32 %s29, 2
        // Predicated region
        $region101: #{tpu_custom_call.1} parent=99 // pred_check
          %p1666 = pneg %p320
        $region102: #{tpu_custom_call.1} parent=99 // pred_check_branch
          %1668 = sbr.rel (%p1666) target = $region104
        $region103: #{tpu_custom_call.1} parent=99 // pred_region
          %s1669 = sand.u32 %s305, 1
          %s1670 = scalar_lea.sflag [#allocation4], %s1669
          %s1671 = sand.u32 %s305, 1
          %s1672 = smul.addr %s1671, 2
          %s1673 = scalar_lea.vmem [#allocation13], %s1672
          %1674 = dma.done %s1670, 32
        $region104: #{tpu_custom_call.1} parent=99 // pred_fallthru
          _
      $region100: #{tpu_custom_call.1} parent=5 // pred_fallthru
        _
    $region6: #{tpu_custom_call.1} parent=1 // loop_footer
      %s33 = sadd.s32 1, %s29
    $region7: #{tpu_custom_call.1} parent=1 // loop_footer_branch
      %28 = sbr.rel target = $region3
    $region8: #{tpu_custom_call.1} parent=1 // loop_exit
      _
    %1675 = vsyncpa [#allocation3], 1
    %s1676 = scalar_lea.sflag [#allocation3], 1
    %1677 = vsyncpa %s1676, 1
    %1678 = vsyncpa [#allocation6], 1
    %s1679 = scalar_lea.sflag [#allocation6], 1
    %1680 = vsyncpa %s1679, 1
    %1681 = vsyncpa [#allocation9], 1
    %1682 = vsyncpa [#allocation12], 1
    %1683 = vsyncpa [#allocation4], 1
    %s1684 = scalar_lea.sflag [#allocation4], 1
    %1685 = vsyncpa %s1684, 1

</llo_original>
